<compile_context>
chip_gen: v7x
topology: tpu7x:2x2x1
jax: 0.10.0
libtpu: 0.0.40
codegen_flags: <defaults>
</compile_context>

<pallas_src>
import jax
import jax.numpy as jnp
from jax.experimental import pallas as pl
from jax.experimental.pallas import tpu as pltpu


_WPAD = 8  # sublane-aligned left margin of the depthwise halo scratch (W axis)


# ----------------------------- in-kernel helpers -----------------------------

def _dw3x3(pad_ref, y_hw, wd, bias_row):
    """3x3 depthwise conv (stride 1, pad 1) on y_hw (H,W,C); BN scale folded into wd.

    pad_ref is a zeroed VMEM scratch (H+2, W+2*_WPAD, C); the image is written at a
    sublane-aligned offset so the halo store is unmasked; tap reads are shifted slices.
    """
    H, W, C = y_hw.shape
    pad_ref[...] = jnp.zeros_like(pad_ref)            # zero borders (VMEM-only, cheap)
    pad_ref[1:H + 1, _WPAD:_WPAD + W, :] = y_hw
    acc = jnp.zeros((H, W, C), jnp.float32)
    for kh in range(3):
        for kw in range(3):
            patch = pad_ref[kh:kh + H, _WPAD - 1 + kw:_WPAD - 1 + kw + W, :]
            acc = acc + patch * wd[kh * 3 + kw][None, None, :]
    return acc + bias_row[None, None, :]              # folded BN bias, no ReLU


# ----------------------------- fused unit kernels -----------------------------

def _unit_s1_kernel(x_ref, w1_ref, c1_ref, wd_ref, cd_ref, w2_ref, c2_ref, pe_ref,
                    o_ref, pad_ref):
    # stride=1 unit: branch1 = identity on x1, branch2 = pw -> dw -> pw on x2.
    H = pad_ref.shape[0] - 2
    W = pad_ref.shape[1] - 2 * _WPAD
    mid = pad_ref.shape[2]

    x2d = x_ref[0]                                    # (H*W, 2*mid)

    # branch2: 1x1 (+folded BN) + ReLU; zero rows in w1 select the x2 channel half.
    y1 = jnp.maximum(
        jnp.dot(x2d, w1_ref[...], preferred_element_type=jnp.float32) + c1_ref[...], 0.0)

    # branch2: 3x3 depthwise + folded BN (no ReLU).
    d = _dw3x3(pad_ref, y1.reshape(H, W, mid), wd_ref[...], cd_ref[0]).reshape(H * W, mid)

    # final 1x1 (+BN+ReLU) pre-scattered into ODD output channels; identity branch
    # scattered into EVEN output channels -> concat + channel shuffle fused in the write.
    b2 = jnp.maximum(
        jnp.dot(d, w2_ref[...], preferred_element_type=jnp.float32) + c2_ref[...], 0.0)
    b1 = jnp.dot(x2d, pe_ref[...], preferred_element_type=jnp.float32)
    o_ref[0] = (b1 + b2).astype(o_ref.dtype)


def _unit_s2_kernel(x_ref, wda_ref, cda_ref, w1_ref, c1_ref,
                    wp_ref, cp_ref, wdb_ref, cdb_ref, w2_ref, c2_ref, sel_ref,
                    o_ref, pada_ref, padb_ref):
    # stride=2 unit: branch1 = dw(s2) -> pw (even channels), branch2 = pw -> dw(s2) -> pw (odd).
    H = pada_ref.shape[0] - 2
    W = pada_ref.shape[1] - 2 * _WPAD
    cin = pada_ref.shape[2]
    mid = padb_ref.shape[2]

    x2d = x_ref[0]                                    # (H*W, cin)
    sel = sel_ref[...]                                # (Ho*Wo, H*W) 0/1 stride-2 selector

    # ---- branch1: 3x3 dw (stride 2) + BN, then 1x1 + BN + ReLU (even output cols) ----
    da = _dw3x3(pada_ref, x2d.reshape(H, W, cin), wda_ref[...], cda_ref[0])
    da = jnp.dot(sel, da.reshape(H * W, cin), preferred_element_type=jnp.float32)
    b1 = jnp.maximum(
        jnp.dot(da, w1_ref[...], preferred_element_type=jnp.float32) + c1_ref[...], 0.0)

    # ---- branch2: 1x1+BN+ReLU -> 3x3 dw (stride 2)+BN -> 1x1+BN+ReLU (odd output cols) ----
    y1 = jnp.maximum(
        jnp.dot(x2d, wp_ref[...], preferred_element_type=jnp.float32) + cp_ref[...], 0.0)
    db = _dw3x3(padb_ref, y1.reshape(H, W, mid), wdb_ref[...], cdb_ref[0])
    db = jnp.dot(sel, db.reshape(H * W, mid), preferred_element_type=jnp.float32)
    b2 = jnp.maximum(
        jnp.dot(db, w2_ref[...], preferred_element_type=jnp.float32) + c2_ref[...], 0.0)

    o_ref[0] = (b1 + b2).astype(o_ref.dtype)


# ----------------------------- forward wrapper -----------------------------

def shuffle_unit_forward(params, x_nchw, stride):
    x = jnp.transpose(x_nchw, (0, 2, 3, 1)).astype(jnp.float32)   # NCHW -> NHWC
    N, H, W, cin = x.shape
    x2d = x.reshape(N, H * W, cin)                                # free reshape in XLA

    if stride == 1:
        mid = cin // 2
        cout = cin
        Ho, Wo = H, W

        # --- one-time parameter folding (tiny) ---
        s1, c1 = params["b2_sb1"]
        w1 = jnp.concatenate(                                     # zero rows pick x2 half
            [jnp.zeros((mid, mid), jnp.float32), params["b2_w1"] * s1[None, :]], axis=0)
        sd, cd = params["b2_sbd"]
        wd = params["b2_dw"].reshape(9, mid) * sd[None, :]
        s2, c2 = params["b2_sb2"]
        w2 = jnp.zeros((mid, cout), jnp.float32).at[:, 1::2].set(params["b2_w2"] * s2[None, :])
        c2o = jnp.zeros((1, cout), jnp.float32).at[:, 1::2].set(c2[None, :])
        pe = jnp.zeros((cin, cout), jnp.float32).at[
            jnp.arange(mid), 2 * jnp.arange(mid)].set(1.0)        # identity -> even channels

        out = pl.pallas_call(
            _unit_s1_kernel,
            out_shape=jax.ShapeDtypeStruct((N, H * W, cout), jnp.float32),
            grid_spec=pltpu.PrefetchScalarGridSpec(
                num_scalar_prefetch=0,
                grid=(N,),
                in_specs=[
                    pl.BlockSpec((1, H * W, cin), lambda n: (n, 0, 0)),
                    pl.BlockSpec((cin, mid), lambda n: (0, 0)),
                    pl.BlockSpec((1, mid), lambda n: (0, 0)),
                    pl.BlockSpec((9, mid), lambda n: (0, 0)),
                    pl.BlockSpec((1, mid), lambda n: (0, 0)),
                    pl.BlockSpec((mid, cout), lambda n: (0, 0)),
                    pl.BlockSpec((1, cout), lambda n: (0, 0)),
                    pl.BlockSpec((cin, cout), lambda n: (0, 0)),
                ],
                out_specs=pl.BlockSpec((1, H * W, cout), lambda n: (n, 0, 0)),
                scratch_shapes=[pltpu.VMEM((H + 2, W + 2 * _WPAD, mid), jnp.float32)],
            ),
            compiler_params=pltpu.CompilerParams(dimension_semantics=("parallel",)),
        )(x2d, w1, c1.reshape(1, mid), wd, cd.reshape(1, mid), w2, c2o, pe)
    else:
        mid = params["b2_w2"].shape[1]
        cout = 2 * mid
        Ho, Wo = H // stride, W // stride

        # --- one-time parameter folding (tiny) ---
        sda, cda = params["b1_sbd"]
        wda = params["b1_dw"].reshape(9, cin) * sda[None, :]
        sa, ca = params["b1_sb"]
        w1 = jnp.zeros((cin, cout), jnp.float32).at[:, 0::2].set(params["b1_w"] * sa[None, :])
        c1 = jnp.zeros((1, cout), jnp.float32).at[:, 0::2].set(ca[None, :])
        sp, cp = params["b2_sb1"]
        wp = params["b2_w1"] * sp[None, :]
        sdb, cdb = params["b2_sbd"]
        wdb = params["b2_dw"].reshape(9, mid) * sdb[None, :]
        s2, c2 = params["b2_sb2"]
        w2 = jnp.zeros((mid, cout), jnp.float32).at[:, 1::2].set(params["b2_w2"] * s2[None, :])
        c2o = jnp.zeros((1, cout), jnp.float32).at[:, 1::2].set(c2[None, :])
        # constant 0/1 selection matrix implementing the exact stride-2 spatial subsample
        ridx = jnp.arange(Ho * Wo)
        src = (ridx // Wo) * (stride * W) + (ridx % Wo) * stride
        sel = jnp.zeros((Ho * Wo, H * W), jnp.float32).at[ridx, src].set(1.0)

        out = pl.pallas_call(
            _unit_s2_kernel,
            out_shape=jax.ShapeDtypeStruct((N, Ho * Wo, cout), jnp.float32),
            grid_spec=pltpu.PrefetchScalarGridSpec(
                num_scalar_prefetch=0,
                grid=(N,),
                in_specs=[
                    pl.BlockSpec((1, H * W, cin), lambda n: (n, 0, 0)),
                    pl.BlockSpec((9, cin), lambda n: (0, 0)),
                    pl.BlockSpec((1, cin), lambda n: (0, 0)),
                    pl.BlockSpec((cin, cout), lambda n: (0, 0)),
                    pl.BlockSpec((1, cout), lambda n: (0, 0)),
                    pl.BlockSpec((cin, mid), lambda n: (0, 0)),
                    pl.BlockSpec((1, mid), lambda n: (0, 0)),
                    pl.BlockSpec((9, mid), lambda n: (0, 0)),
                    pl.BlockSpec((1, mid), lambda n: (0, 0)),
                    pl.BlockSpec((mid, cout), lambda n: (0, 0)),
                    pl.BlockSpec((1, cout), lambda n: (0, 0)),
                    pl.BlockSpec((Ho * Wo, H * W), lambda n: (0, 0)),
                ],
                out_specs=pl.BlockSpec((1, Ho * Wo, cout), lambda n: (n, 0, 0)),
                scratch_shapes=[pltpu.VMEM((H + 2, W + 2 * _WPAD, cin), jnp.float32),
                                pltpu.VMEM((H + 2, W + 2 * _WPAD, mid), jnp.float32)],
            ),
            compiler_params=pltpu.CompilerParams(dimension_semantics=("parallel",)),
        )(x2d, wda, cda.reshape(1, cin), w1, c1, wp, cp.reshape(1, mid),
          wdb, cdb.reshape(1, mid), w2, c2o, sel)

    out = out.reshape(N, Ho, Wo, cout)
    return jnp.transpose(out, (0, 3, 1, 2))           # NHWC -> NCHW


# ----------------------------- pure-JAX reference -----------------------------

def _ref_pw(x, w, scale, bias):
    y = jnp.einsum("nhwc,cd->nhwd", x, w)
    return jnp.maximum(y * scale + bias, 0.0)


def _ref_dw(x, w, scale, bias, stride):
    C = x.shape[-1]
    y = jax.lax.conv_general_dilated(
        x, w.reshape(3, 3, 1, C), window_strides=(stride, stride),
        padding=((1, 1), (1, 1)), dimension_numbers=("NHWC", "HWIO", "NHWC"),
        feature_group_count=C)
    return y * scale + bias


def shuffle_unit_reference(params, x_nchw, stride):
    x = jnp.transpose(x_nchw, (0, 2, 3, 1))
    if stride == 1:
        C = x.shape[-1]
        x1, x2 = x[..., :C // 2], x[..., C // 2:]
        b1 = x1
        b2 = _ref_pw(x2, params["b2_w1"], *params["b2_sb1"])
        b2 = _ref_dw(b2, params["b2_dw"], *params["b2_sbd"], stride)
        b2 = _ref_pw(b2, params["b2_w2"], *params["b2_sb2"])
    else:
        b1 = _ref_dw(x, params["b1_dw"], *params["b1_sbd"], stride)
        b1 = _ref_pw(b1, params["b1_w"], *params["b1_sb"])
        b2 = _ref_pw(x, params["b2_w1"], *params["b2_sb1"])
        b2 = _ref_dw(b2, params["b2_dw"], *params["b2_sbd"], stride)
        b2 = _ref_pw(b2, params["b2_w2"], *params["b2_sb2"])
    out = jnp.concatenate([b1, b2], axis=-1)
    N, H, W, C = out.shape
    out = out.reshape(N, H, W, 2, C // 2).transpose(0, 1, 2, 4, 3).reshape(N, H, W, C)
    return jnp.transpose(out, (0, 3, 1, 2))


# ----------------------------- deterministic parameter init -----------------------------

def _bn_fold(gamma, beta, mean, var, eps=1e-5):
    s = gamma / jnp.sqrt(var + eps)
    return s, beta - mean * s


def init_params(key, in_channels, out_channels, stride):
    mid = out_channels // 2
    ks = iter(jax.random.split(key, 40))

    def conv1x1(cin, cout):
        return jax.random.normal(next(ks), (cin, cout), jnp.float32) / jnp.sqrt(float(cin))

    def dw3x3(c):
        return jax.random.normal(next(ks), (3, 3, c), jnp.float32) / 3.0

    def bn(c):
        gamma = 0.5 + jax.random.uniform(next(ks), (c,), jnp.float32)
        beta = 0.1 * jax.random.normal(next(ks), (c,), jnp.float32)
        mean = 0.1 * jax.random.normal(next(ks), (c,), jnp.float32)
        var = 0.5 + jax.random.uniform(next(ks), (c,), jnp.float32)
        return _bn_fold(gamma, beta, mean, var)

    p = {}
    if stride > 1:
        p["b1_dw"] = dw3x3(in_channels)
        p["b1_sbd"] = bn(in_channels)
        p["b1_w"] = conv1x1(in_channels, mid)
        p["b1_sb"] = bn(mid)
        c2_in = in_channels
    else:
        c2_in = mid  # requires in_channels == out_channels (as in ShuffleNet-v2)
    p["b2_w1"] = conv1x1(c2_in, mid)
    p["b2_sb1"] = bn(mid)
    p["b2_dw"] = dw3x3(mid)
    p["b2_sbd"] = bn(mid)
    p["b2_w2"] = conv1x1(mid, mid)
    p["b2_sb2"] = bn(mid)
    return p


# ----------------------------- main -----------------------------

if __name__ == "__main__":
    key = jax.random.PRNGKey(0)
    kx, kp1, kp2 = jax.random.split(key, 3)
    x = jax.random.normal(kx, (2, 32, 16, 16), jnp.float32)  # NCHW, like PyTorch

    fwd = jax.jit(shuffle_unit_forward, static_argnums=2)

    # stride=1 unit (in_channels == out_channels == 32)
    p1 = init_params(kp1, 32, 32, 1)
    out1 = jax.block_until_ready(fwd(p1, x, 1))
    ref1 = jax.block_until_ready(shuffle_unit_reference(p1, x, 1))
    assert out1.shape == (2, 32, 16, 16), out1.shape
    assert jnp.allclose(out1, ref1, rtol=2e-2, atol=2e-2), float(jnp.max(jnp.abs(out1 - ref1)))

    # stride=2 unit (32 -> 64, spatial downsample)
    p2 = init_params(kp2, 32, 64, 2)
    out2 = jax.block_until_ready(fwd(p2, x, 2))
    ref2 = jax.block_until_ready(shuffle_unit_reference(p2, x, 2))
    assert out2.shape == (2, 64, 8, 8), out2.shape
    assert jnp.allclose(out2, ref2, rtol=2e-2, atol=2e-2), float(jnp.max(jnp.abs(out2 - ref2)))

    print("KERNEL_OK")
</pallas_src>

<mosaic_0001>
module attributes {stable_mosaic.version = 11 : i64} {
  func.func @_unit_s1_kernel(%arg0: i32, %arg1: memref<1x256x32xf32, #tpu.memory_space<vmem>>, %arg2: memref<32x16xf32, #tpu.memory_space<vmem>>, %arg3: memref<1x16xf32, #tpu.memory_space<vmem>>, %arg4: memref<9x16xf32, #tpu.memory_space<vmem>>, %arg5: memref<1x16xf32, #tpu.memory_space<vmem>>, %arg6: memref<16x32xf32, #tpu.memory_space<vmem>>, %arg7: memref<1x32xf32, #tpu.memory_space<vmem>>, %arg8: memref<32x32xf32, #tpu.memory_space<vmem>>, %arg9: memref<1x256x32xf32, #tpu.memory_space<vmem>>, %arg10: memref<18x32x16xf32, #tpu.memory_space<vmem>>) attributes {dimension_semantics = [#tpu.dimension_semantics<parallel>], iteration_bounds = array<i64: 2>, scalar_prefetch = 0 : i64, scratch_operands = 1 : i64, tpu.core_type = #tpu.core_type<tc>, window_params = [{transform_indices = @transform_0, window_bounds = array<i64: 1, 256, 32>}, {pipeline_mode = #tpu.pipeline_mode<synchronous>, transform_indices = @transform_1, window_bounds = array<i64: 32, 16>}, {pipeline_mode = #tpu.pipeline_mode<synchronous>, transform_indices = @transform_2, window_bounds = array<i64: 1, 16>}, {pipeline_mode = #tpu.pipeline_mode<synchronous>, transform_indices = @transform_3, window_bounds = array<i64: 9, 16>}, {pipeline_mode = #tpu.pipeline_mode<synchronous>, transform_indices = @transform_4, window_bounds = array<i64: 1, 16>}, {pipeline_mode = #tpu.pipeline_mode<synchronous>, transform_indices = @transform_5, window_bounds = array<i64: 16, 32>}, {pipeline_mode = #tpu.pipeline_mode<synchronous>, transform_indices = @transform_6, window_bounds = array<i64: 1, 32>}, {pipeline_mode = #tpu.pipeline_mode<synchronous>, transform_indices = @transform_7, window_bounds = array<i64: 32, 32>}, {transform_indices = @transform_8, window_bounds = array<i64: 1, 256, 32>}]} {
    %c0 = arith.constant 0 : index
    %c0_0 = arith.constant 0 : index
    %c0_1 = arith.constant 0 : index
    %0 = vector.load %arg1[%c0, %c0_0, %c0_1] : memref<1x256x32xf32, #tpu.memory_space<vmem>>, vector<1x256x32xf32>
    %1 = vector.shape_cast %0 : vector<1x256x32xf32> to vector<256x32xf32>
    %c0_2 = arith.constant 0 : index
    %c0_3 = arith.constant 0 : index
    %2 = vector.load %arg2[%c0_2, %c0_3] : memref<32x16xf32, #tpu.memory_space<vmem>>, vector<32x16xf32>
    %cst = arith.constant dense<0.000000e+00> : vector<256x16xf32>
    %3 = tpu.matmul %1, %2, %cst {dimension_numbers = #tpu.dot_dimension_numbers<[1], [0], [0], [1], [0, 0, 1, 1], [], []>} : vector<256x32xf32>, vector<32x16xf32>, vector<256x16xf32> -> vector<256x16xf32>
    %c0_4 = arith.constant 0 : index
    %c0_5 = arith.constant 0 : index
    %4 = vector.load %arg3[%c0_4, %c0_5] : memref<1x16xf32, #tpu.memory_space<vmem>>, vector<1x16xf32>
    %5 = vector.broadcast %4 : vector<1x16xf32> to vector<256x16xf32>
    %6 = arith.addf %3, %5 : vector<256x16xf32>
    %cst_6 = arith.constant 0.000000e+00 : f32
    %7 = vector.broadcast %cst_6 : f32 to vector<256x16xf32>
    %8 = arith.maximumf %6, %7 : vector<256x16xf32>
    %9 = vector.shape_cast %8 : vector<256x16xf32> to vector<16x16x16xf32>
    %c0_7 = arith.constant 0 : index
    %c0_8 = arith.constant 0 : index
    %10 = vector.load %arg4[%c0_7, %c0_8] : memref<9x16xf32, #tpu.memory_space<vmem>>, vector<9x16xf32>
    %c0_9 = arith.constant 0 : index
    %c0_10 = arith.constant 0 : index
    %11 = vector.load %arg5[%c0_9, %c0_10] : memref<1x16xf32, #tpu.memory_space<vmem>>, vector<1x16xf32>
    %12 = vector.shape_cast %11 : vector<1x16xf32> to vector<16xf32>
    %cst_11 = arith.constant 0.000000e+00 : f32
    %13 = vector.broadcast %cst_11 : f32 to vector<18x32x16xf32>
    %c0_12 = arith.constant 0 : index
    %c0_13 = arith.constant 0 : index
    %c0_14 = arith.constant 0 : index
    %14 = vector.load %arg10[%c0_12, %c0_13, %c0_14] : memref<18x32x16xf32, #tpu.memory_space<vmem>>, vector<18x32x16xf32>
    tpu.vector_store %arg10[%c0_12, %c0_13, %c0_14], %13 {strides = array<i32>} : memref<18x32x16xf32, #tpu.memory_space<vmem>>, vector<18x32x16xf32>,
    %c1 = arith.constant 1 : index
    %c8 = arith.constant 8 : index
    %c0_15 = arith.constant 0 : index
    %15 = vector.load %arg10[%c1, %c8, %c0_15] : memref<18x32x16xf32, #tpu.memory_space<vmem>>, vector<16x16x16xf32>
    tpu.vector_store %arg10[%c1, %c8, %c0_15], %9 {strides = array<i32>} : memref<18x32x16xf32, #tpu.memory_space<vmem>>, vector<16x16x16xf32>,
    %cst_16 = arith.constant 0.000000e+00 : f32
    %16 = vector.broadcast %cst_16 : f32 to vector<16x16x16xf32>
    %c0_17 = arith.constant 0 : index
    %c7 = arith.constant 7 : index
    %c0_18 = arith.constant 0 : index
    %17 = vector.load %arg10[%c0_17, %c7, %c0_18] : memref<18x32x16xf32, #tpu.memory_space<vmem>>, vector<16x16x16xf32>
    %18 = vector.extract_strided_slice %10 {offsets = [0, 0], sizes = [1, 16], strides = [1, 1]} : vector<9x16xf32> to vector<1x16xf32>
    %19 = vector.shape_cast %18 : vector<1x16xf32> to vector<16xf32>
    %20 = vector.shape_cast %19 : vector<16xf32> to vector<1x1x16xf32>
    %21 = vector.broadcast %20 : vector<1x1x16xf32> to vector<16x16x16xf32>
    %22 = arith.mulf %17, %21 : vector<16x16x16xf32>
    %23 = arith.addf %16, %22 : vector<16x16x16xf32>
    %c0_19 = arith.constant 0 : index
    %c8_20 = arith.constant 8 : index
    %c0_21 = arith.constant 0 : index
    %24 = vector.load %arg10[%c0_19, %c8_20, %c0_21] : memref<18x32x16xf32, #tpu.memory_space<vmem>>, vector<16x16x16xf32>
    %25 = vector.extract_strided_slice %10 {offsets = [1, 0], sizes = [1, 16], strides = [1, 1]} : vector<9x16xf32> to vector<1x16xf32>
    %26 = vector.shape_cast %25 : vector<1x16xf32> to vector<16xf32>
    %27 = vector.shape_cast %26 : vector<16xf32> to vector<1x1x16xf32>
    %28 = vector.broadcast %27 : vector<1x1x16xf32> to vector<16x16x16xf32>
    %29 = arith.mulf %24, %28 : vector<16x16x16xf32>
    %30 = arith.addf %23, %29 : vector<16x16x16xf32>
    %c0_22 = arith.constant 0 : index
    %c9 = arith.constant 9 : index
    %c0_23 = arith.constant 0 : index
    %31 = vector.load %arg10[%c0_22, %c9, %c0_23] : memref<18x32x16xf32, #tpu.memory_space<vmem>>, vector<16x16x16xf32>
    %32 = vector.extract_strided_slice %10 {offsets = [2, 0], sizes = [1, 16], strides = [1, 1]} : vector<9x16xf32> to vector<1x16xf32>
    %33 = vector.shape_cast %32 : vector<1x16xf32> to vector<16xf32>
    %34 = vector.shape_cast %33 : vector<16xf32> to vector<1x1x16xf32>
    %35 = vector.broadcast %34 : vector<1x1x16xf32> to vector<16x16x16xf32>
    %36 = arith.mulf %31, %35 : vector<16x16x16xf32>
    %37 = arith.addf %30, %36 : vector<16x16x16xf32>
    %c1_24 = arith.constant 1 : index
    %c7_25 = arith.constant 7 : index
    %c0_26 = arith.constant 0 : index
    %38 = vector.load %arg10[%c1_24, %c7_25, %c0_26] : memref<18x32x16xf32, #tpu.memory_space<vmem>>, vector<16x16x16xf32>
    %39 = vector.extract_strided_slice %10 {offsets = [3, 0], sizes = [1, 16], strides = [1, 1]} : vector<9x16xf32> to vector<1x16xf32>
    %40 = vector.shape_cast %39 : vector<1x16xf32> to vector<16xf32>
    %41 = vector.shape_cast %40 : vector<16xf32> to vector<1x1x16xf32>
    %42 = vector.broadcast %41 : vector<1x1x16xf32> to vector<16x16x16xf32>
    %43 = arith.mulf %38, %42 : vector<16x16x16xf32>
    %44 = arith.addf %37, %43 : vector<16x16x16xf32>
    %c1_27 = arith.constant 1 : index
    %c8_28 = arith.constant 8 : index
    %c0_29 = arith.constant 0 : index
    %45 = vector.load %arg10[%c1_27, %c8_28, %c0_29] : memref<18x32x16xf32, #tpu.memory_space<vmem>>, vector<16x16x16xf32>
    %46 = vector.extract_strided_slice %10 {offsets = [4, 0], sizes = [1, 16], strides = [1, 1]} : vector<9x16xf32> to vector<1x16xf32>
    %47 = vector.shape_cast %46 : vector<1x16xf32> to vector<16xf32>
    %48 = vector.shape_cast %47 : vector<16xf32> to vector<1x1x16xf32>
    %49 = vector.broadcast %48 : vector<1x1x16xf32> to vector<16x16x16xf32>
    %50 = arith.mulf %45, %49 : vector<16x16x16xf32>
    %51 = arith.addf %44, %50 : vector<16x16x16xf32>
    %c1_30 = arith.constant 1 : index
    %c9_31 = arith.constant 9 : index
    %c0_32 = arith.constant 0 : index
    %52 = vector.load %arg10[%c1_30, %c9_31, %c0_32] : memref<18x32x16xf32, #tpu.memory_space<vmem>>, vector<16x16x16xf32>
    %53 = vector.extract_strided_slice %10 {offsets = [5, 0], sizes = [1, 16], strides = [1, 1]} : vector<9x16xf32> to vector<1x16xf32>
    %54 = vector.shape_cast %53 : vector<1x16xf32> to vector<16xf32>
    %55 = vector.shape_cast %54 : vector<16xf32> to vector<1x1x16xf32>
    %56 = vector.broadcast %55 : vector<1x1x16xf32> to vector<16x16x16xf32>
    %57 = arith.mulf %52, %56 : vector<16x16x16xf32>
    %58 = arith.addf %51, %57 : vector<16x16x16xf32>
    %c2 = arith.constant 2 : index
    %c7_33 = arith.constant 7 : index
    %c0_34 = arith.constant 0 : index
    %59 = vector.load %arg10[%c2, %c7_33, %c0_34] : memref<18x32x16xf32, #tpu.memory_space<vmem>>, vector<16x16x16xf32>
    %60 = vector.extract_strided_slice %10 {offsets = [6, 0], sizes = [1, 16], strides = [1, 1]} : vector<9x16xf32> to vector<1x16xf32>
    %61 = vector.shape_cast %60 : vector<1x16xf32> to vector<16xf32>
    %62 = vector.shape_cast %61 : vector<16xf32> to vector<1x1x16xf32>
    %63 = vector.broadcast %62 : vector<1x1x16xf32> to vector<16x16x16xf32>
    %64 = arith.mulf %59, %63 : vector<16x16x16xf32>
    %65 = arith.addf %58, %64 : vector<16x16x16xf32>
    %c2_35 = arith.constant 2 : index
    %c8_36 = arith.constant 8 : index
    %c0_37 = arith.constant 0 : index
    %66 = vector.load %arg10[%c2_35, %c8_36, %c0_37] : memref<18x32x16xf32, #tpu.memory_space<vmem>>, vector<16x16x16xf32>
    %67 = vector.extract_strided_slice %10 {offsets = [7, 0], sizes = [1, 16], strides = [1, 1]} : vector<9x16xf32> to vector<1x16xf32>
    %68 = vector.shape_cast %67 : vector<1x16xf32> to vector<16xf32>
    %69 = vector.shape_cast %68 : vector<16xf32> to vector<1x1x16xf32>
    %70 = vector.broadcast %69 : vector<1x1x16xf32> to vector<16x16x16xf32>
    %71 = arith.mulf %66, %70 : vector<16x16x16xf32>
    %72 = arith.addf %65, %71 : vector<16x16x16xf32>
    %c2_38 = arith.constant 2 : index
    %c9_39 = arith.constant 9 : index
    %c0_40 = arith.constant 0 : index
    %73 = vector.load %arg10[%c2_38, %c9_39, %c0_40] : memref<18x32x16xf32, #tpu.memory_space<vmem>>, vector<16x16x16xf32>
    %74 = vector.extract_strided_slice %10 {offsets = [8, 0], sizes = [1, 16], strides = [1, 1]} : vector<9x16xf32> to vector<1x16xf32>
    %75 = vector.shape_cast %74 : vector<1x16xf32> to vector<16xf32>
    %76 = vector.shape_cast %75 : vector<16xf32> to vector<1x1x16xf32>
    %77 = vector.broadcast %76 : vector<1x1x16xf32> to vector<16x16x16xf32>
    %78 = arith.mulf %73, %77 : vector<16x16x16xf32>
    %79 = arith.addf %72, %78 : vector<16x16x16xf32>
    %80 = vector.shape_cast %12 : vector<16xf32> to vector<1x1x16xf32>
    %81 = vector.broadcast %80 : vector<1x1x16xf32> to vector<16x16x16xf32>
    %82 = arith.addf %79, %81 : vector<16x16x16xf32>
    %83 = vector.shape_cast %82 : vector<16x16x16xf32> to vector<256x16xf32>
    %c0_41 = arith.constant 0 : index
    %c0_42 = arith.constant 0 : index
    %84 = vector.load %arg6[%c0_41, %c0_42] : memref<16x32xf32, #tpu.memory_space<vmem>>, vector<16x32xf32>
    %cst_43 = arith.constant dense<0.000000e+00> : vector<256x32xf32>
    %85 = tpu.matmul %83, %84, %cst_43 {dimension_numbers = #tpu.dot_dimension_numbers<[1], [0], [0], [1], [0, 0, 1, 1], [], []>} : vector<256x16xf32>, vector<16x32xf32>, vector<256x32xf32> -> vector<256x32xf32>
    %c0_44 = arith.constant 0 : index
    %c0_45 = arith.constant 0 : index
    %86 = vector.load %arg7[%c0_44, %c0_45] : memref<1x32xf32, #tpu.memory_space<vmem>>, vector<1x32xf32>
    %87 = vector.broadcast %86 : vector<1x32xf32> to vector<256x32xf32>
    %88 = arith.addf %85, %87 : vector<256x32xf32>
    %cst_46 = arith.constant 0.000000e+00 : f32
    %89 = vector.broadcast %cst_46 : f32 to vector<256x32xf32>
    %90 = arith.maximumf %88, %89 : vector<256x32xf32>
    %c0_47 = arith.constant 0 : index
    %c0_48 = arith.constant 0 : index
    %91 = vector.load %arg8[%c0_47, %c0_48] : memref<32x32xf32, #tpu.memory_space<vmem>>, vector<32x32xf32>
    %cst_49 = arith.constant dense<0.000000e+00> : vector<256x32xf32>
    %92 = tpu.matmul %1, %91, %cst_49 {dimension_numbers = #tpu.dot_dimension_numbers<[1], [0], [0], [1], [0, 0, 1, 1], [], []>} : vector<256x32xf32>, vector<32x32xf32>, vector<256x32xf32> -> vector<256x32xf32>
    %93 = arith.addf %92, %90 : vector<256x32xf32>
    %c0_50 = arith.constant 0 : index
    %c0_51 = arith.constant 0 : index
    %c0_52 = arith.constant 0 : index
    %94 = vector.load %arg9[%c0_50, %c0_51, %c0_52] : memref<1x256x32xf32, #tpu.memory_space<vmem>>, vector<1x256x32xf32>
    %95 = vector.shape_cast %94 : vector<1x256x32xf32> to vector<256x32xf32>
    %96 = vector.shape_cast %93 : vector<256x32xf32> to vector<1x256x32xf32>
    tpu.vector_store %arg9[%c0_50, %c0_51, %c0_52], %96 {strides = array<i32>} : memref<1x256x32xf32, #tpu.memory_space<vmem>>, vector<1x256x32xf32>,
    return
  }
  func.func @transform_0(%arg0: i32) -> (i32, i32, i32) {
    %c0_i32 = arith.constant 0 : i32
    %c0_i32_0 = arith.constant 0 : i32
    %c0_i32_1 = arith.constant 0 : i32
    return %arg0, %c0_i32, %c0_i32_0 : i32, i32, i32
  }
  func.func @transform_1(%arg0: i32) -> (i32, i32) {
    %c0_i32 = arith.constant 0 : i32
    %c0_i32_0 = arith.constant 0 : i32
    %c0_i32_1 = arith.constant 0 : i32
    return %c0_i32, %c0_i32_0 : i32, i32
  }
  func.func @transform_2(%arg0: i32) -> (i32, i32) {
    %c0_i32 = arith.constant 0 : i32
    %c0_i32_0 = arith.constant 0 : i32
    %c0_i32_1 = arith.constant 0 : i32
    return %c0_i32, %c0_i32_0 : i32, i32
  }
  func.func @transform_3(%arg0: i32) -> (i32, i32) {
    %c0_i32 = arith.constant 0 : i32
    %c0_i32_0 = arith.constant 0 : i32
    %c0_i32_1 = arith.constant 0 : i32
    return %c0_i32, %c0_i32_0 : i32, i32
  }
  func.func @transform_4(%arg0: i32) -> (i32, i32) {
    %c0_i32 = arith.constant 0 : i32
    %c0_i32_0 = arith.constant 0 : i32
    %c0_i32_1 = arith.constant 0 : i32
    return %c0_i32, %c0_i32_0 : i32, i32
  }
  func.func @transform_5(%arg0: i32) -> (i32, i32) {
    %c0_i32 = arith.constant 0 : i32
    %c0_i32_0 = arith.constant 0 : i32
    %c0_i32_1 = arith.constant 0 : i32
    return %c0_i32, %c0_i32_0 : i32, i32
  }
  func.func @transform_6(%arg0: i32) -> (i32, i32) {
    %c0_i32 = arith.constant 0 : i32
    %c0_i32_0 = arith.constant 0 : i32
    %c0_i32_1 = arith.constant 0 : i32
    return %c0_i32, %c0_i32_0 : i32, i32
  }
  func.func @transform_7(%arg0: i32) -> (i32, i32) {
    %c0_i32 = arith.constant 0 : i32
    %c0_i32_0 = arith.constant 0 : i32
    %c0_i32_1 = arith.constant 0 : i32
    return %c0_i32, %c0_i32_0 : i32, i32
  }
  func.func @transform_8(%arg0: i32) -> (i32, i32, i32) {
    %c0_i32 = arith.constant 0 : i32
    %c0_i32_0 = arith.constant 0 : i32
    %c0_i32_1 = arith.constant 0 : i32
    return %arg0, %c0_i32, %c0_i32_0 : i32, i32, i32
  }
}

</mosaic_0001>

<llo_original>
// kernel: shuffle_unit_forward.1
$region0: #{shuffle_unit_forward.1}
  #allocation0 [shape = 'u32[]', space=smem, size = 0x4, offset = 0x4, fixed_abs, tag = 'smem constant byte address 0x4 - core index']
  #allocation1 [shape = 'u32[144,128]{1,0:T(1,128)}', space=vmem, size = 0x12000, scoped, tag = 'internal scratch']
  #allocation2 [shape = 'f32[18,32,16]{2,1,0:T(8,128)}', space=vmem, size = 0x48000, scoped, tag = 'scratch operand']
  %s0 = inlined_call_operand.vmem [shape: f32[2,256,32], index: 0, kind: input, shape index: {}]
  %s1 = inlined_call_operand.vmem [shape: f32[32,16], index: 1, kind: input, shape index: {}]
  %s2 = inlined_call_operand.vmem [shape: f32[1,16], index: 2, kind: input, shape index: {}]
  %s3 = inlined_call_operand.vmem [shape: f32[9,16], index: 3, kind: input, shape index: {}]
  %s4 = inlined_call_operand.vmem [shape: f32[1,16], index: 4, kind: input, shape index: {}]
  %s5 = inlined_call_operand.vmem [shape: f32[16,32], index: 5, kind: input, shape index: {}]
  %s6 = inlined_call_operand.vmem [shape: f32[1,32], index: 6, kind: input, shape index: {}]
  %s7 = inlined_call_operand.vmem [shape: f32[32,32], index: 7, kind: input, shape index: {}]
  %s8 = inlined_call_operand.hbm [shape: f32[2,256,32], index: 8, kind: output, shape index: {}]
  %s9 = sld [smem:[#allocation0]]
  $region65: #{shuffle_unit_forward.1} parent=0
    _
  %s11 = ssub.s32 1, %s9
  %s12 = scalar_select 0, %s11, %s9
  $region1: #{shuffle_unit_forward.1} parent=0
    #allocation3 [shape = 'u8[262144]{0}', space=vmem, size = 0x40000, scoped, tag = 'output window, operand 0']
    #allocation4 [shape = 's32[2]{0}', space=sflag, size = 0x8, scoped, tag = 'scoped memory for shuffle_unit_forward.1']
    %13 = vsyncpa [#allocation4], 0
    %s14 = scalar_lea.sflag [#allocation4], 1
    %15 = vsyncpa %s14, 0
    loop: start=0, step=1, limit=4
    $region2: #{shuffle_unit_forward.1} parent=1 // loop_pre_header
      _
    $region3: #{shuffle_unit_forward.1} parent=1 // loop_header
      %s17 = sphi 0, %s21
      %p18 = scmp.ge.s32.totalorder %s17, 4
      %s27 = sphi 0, %s29
      %s30 = sphi 0, %s27
      %s31 = sphi 0, %s30
      %s47 = sphi 0, %s31
      %s51 = sphi 0, %s51
      %s53 = sphi 0, %s51
      %s54 = sphi 0, %s53
      %s68 = sphi 0, %s54
      %s72 = sphi 0, %s72
      %s74 = sphi 0, %s72
      %s75 = sphi 0, %s74
      %s89 = sphi 0, %s75
      %s93 = sphi 0, %s93
      %s95 = sphi 0, %s93
      %s96 = sphi 0, %s95
      %s110 = sphi 0, %s96
      %s114 = sphi 0, %s114
      %s116 = sphi 0, %s114
      %s117 = sphi 0, %s116
      %s131 = sphi 0, %s117
      %s135 = sphi 0, %s135
      %s137 = sphi 0, %s135
      %s138 = sphi 0, %s137
      %s152 = sphi 0, %s138
      %s156 = sphi 0, %s156
      %s158 = sphi 0, %s156
      %s159 = sphi 0, %s158
      %s173 = sphi 0, %s159
      %s177 = sphi 0, %s177
      %s179 = sphi 0, %s177
      %s180 = sphi 0, %s179
      %s194 = sphi 0, %s180
      %s200 = sphi 0, %s202
      %s203 = sphi 0, %s200
      %s204 = sphi 0, %s203
      %s220 = sphi 0, %s204
    $region4: #{shuffle_unit_forward.1} parent=1 // loop_header_branch
      %20 = sbr.rel (%p18) target = $region8
    $region5: #{shuffle_unit_forward.1} parent=1 // loop_body
      %s22 = ssub.s32 %s17, 1
      %s23 = ssub.s32 %s17, 2
      %s24 = sadd.s32 %s17, 1
      %s25 = ssub.s32 %s17, %s24
      %p26 = scmp.eq.s32.totalorder %s25, 0
      %s28 = sadd.s32 %s27, 1
      %s29 = scalar_select %p26, %s27, %s28
      %p32 = pneg %p26
      %p33 = scmp.eq.s32.totalorder %s17, 1
      %p34 = por %p32, %p33
      %p35 = scmp.ne.s32.totalorder %s27, %s30
      %p36 = scmp.eq.s32.totalorder %s17, 0
      %p37 = por %p35, %p36
      %p38 = scmp.ne.s32.totalorder %s27, %s30
      %p39 = scmp.eq.s32.totalorder %s22, 1
      %p40 = por %p38, %p39
      %p41 = scmp.ne.s32.totalorder %s30, %s31
      %p42 = scmp.eq.s32.totalorder %s22, 0
      %p43 = por %p41, %p42
      %p44 = scmp.ne.s32.totalorder %s30, %s31
      %p45 = scmp.eq.s32.totalorder %s23, 1
      %p46 = por %p44, %p45
      %p48 = scmp.ne.s32.totalorder %s31, %s47
      %p49 = scmp.eq.s32.totalorder %s23, 0
      %p50 = por %p48, %p49
      %s52 = sadd.s32 %s51, 1
      %p55 = scmp.eq.s32.totalorder %s17, 1
      %p56 = scmp.ne.s32.totalorder %s51, %s53
      %p57 = scmp.eq.s32.totalorder %s17, 0
      %p58 = por %p56, %p57
      %p59 = scmp.ne.s32.totalorder %s51, %s53
      %p60 = scmp.eq.s32.totalorder %s22, 1
      %p61 = por %p59, %p60
      %p62 = scmp.ne.s32.totalorder %s53, %s54
      %p63 = scmp.eq.s32.totalorder %s22, 0
      %p64 = por %p62, %p63
      %p65 = scmp.ne.s32.totalorder %s53, %s54
      %p66 = scmp.eq.s32.totalorder %s23, 1
      %p67 = por %p65, %p66
      %p69 = scmp.ne.s32.totalorder %s54, %s68
      %p70 = scmp.eq.s32.totalorder %s23, 0
      %p71 = por %p69, %p70
      %s73 = sadd.s32 %s72, 1
      %p76 = scmp.eq.s32.totalorder %s17, 1
      %p77 = scmp.ne.s32.totalorder %s72, %s74
      %p78 = scmp.eq.s32.totalorder %s17, 0
      %p79 = por %p77, %p78
      %p80 = scmp.ne.s32.totalorder %s72, %s74
      %p81 = scmp.eq.s32.totalorder %s22, 1
      %p82 = por %p80, %p81
      %p83 = scmp.ne.s32.totalorder %s74, %s75
      %p84 = scmp.eq.s32.totalorder %s22, 0
      %p85 = por %p83, %p84
      %p86 = scmp.ne.s32.totalorder %s74, %s75
      %p87 = scmp.eq.s32.totalorder %s23, 1
      %p88 = por %p86, %p87
      %p90 = scmp.ne.s32.totalorder %s75, %s89
      %p91 = scmp.eq.s32.totalorder %s23, 0
      %p92 = por %p90, %p91
      %s94 = sadd.s32 %s93, 1
      %p97 = scmp.eq.s32.totalorder %s17, 1
      %p98 = scmp.ne.s32.totalorder %s93, %s95
      %p99 = scmp.eq.s32.totalorder %s17, 0
      %p100 = por %p98, %p99
      %p101 = scmp.ne.s32.totalorder %s93, %s95
      %p102 = scmp.eq.s32.totalorder %s22, 1
      %p103 = por %p101, %p102
      %p104 = scmp.ne.s32.totalorder %s95, %s96
      %p105 = scmp.eq.s32.totalorder %s22, 0
      %p106 = por %p104, %p105
      %p107 = scmp.ne.s32.totalorder %s95, %s96
      %p108 = scmp.eq.s32.totalorder %s23, 1
      %p109 = por %p107, %p108
      %p111 = scmp.ne.s32.totalorder %s96, %s110
      %p112 = scmp.eq.s32.totalorder %s23, 0
      %p113 = por %p111, %p112
      %s115 = sadd.s32 %s114, 1
      %p118 = scmp.eq.s32.totalorder %s17, 1
      %p119 = scmp.ne.s32.totalorder %s114, %s116
      %p120 = scmp.eq.s32.totalorder %s17, 0
      %p121 = por %p119, %p120
      %p122 = scmp.ne.s32.totalorder %s114, %s116
      %p123 = scmp.eq.s32.totalorder %s22, 1
      %p124 = por %p122, %p123
      %p125 = scmp.ne.s32.totalorder %s116, %s117
      %p126 = scmp.eq.s32.totalorder %s22, 0
      %p127 = por %p125, %p126
      %p128 = scmp.ne.s32.totalorder %s116, %s117
      %p129 = scmp.eq.s32.totalorder %s23, 1
      %p130 = por %p128, %p129
      %p132 = scmp.ne.s32.totalorder %s117, %s131
      %p133 = scmp.eq.s32.totalorder %s23, 0
      %p134 = por %p132, %p133
      %s136 = sadd.s32 %s135, 1
      %p139 = scmp.eq.s32.totalorder %s17, 1
      %p140 = scmp.ne.s32.totalorder %s135, %s137
      %p141 = scmp.eq.s32.totalorder %s17, 0
      %p142 = por %p140, %p141
      %p143 = scmp.ne.s32.totalorder %s135, %s137
      %p144 = scmp.eq.s32.totalorder %s22, 1
      %p145 = por %p143, %p144
      %p146 = scmp.ne.s32.totalorder %s137, %s138
      %p147 = scmp.eq.s32.totalorder %s22, 0
      %p148 = por %p146, %p147
      %p149 = scmp.ne.s32.totalorder %s137, %s138
      %p150 = scmp.eq.s32.totalorder %s23, 1
      %p151 = por %p149, %p150
      %p153 = scmp.ne.s32.totalorder %s138, %s152
      %p154 = scmp.eq.s32.totalorder %s23, 0
      %p155 = por %p153, %p154
      %s157 = sadd.s32 %s156, 1
      %p160 = scmp.eq.s32.totalorder %s17, 1
      %p161 = scmp.ne.s32.totalorder %s156, %s158
      %p162 = scmp.eq.s32.totalorder %s17, 0
      %p163 = por %p161, %p162
      %p164 = scmp.ne.s32.totalorder %s156, %s158
      %p165 = scmp.eq.s32.totalorder %s22, 1
      %p166 = por %p164, %p165
      %p167 = scmp.ne.s32.totalorder %s158, %s159
      %p168 = scmp.eq.s32.totalorder %s22, 0
      %p169 = por %p167, %p168
      %p170 = scmp.ne.s32.totalorder %s158, %s159
      %p171 = scmp.eq.s32.totalorder %s23, 1
      %p172 = por %p170, %p171
      %p174 = scmp.ne.s32.totalorder %s159, %s173
      %p175 = scmp.eq.s32.totalorder %s23, 0
      %p176 = por %p174, %p175
      %s178 = sadd.s32 %s177, 1
      %p181 = scmp.eq.s32.totalorder %s17, 1
      %p182 = scmp.ne.s32.totalorder %s177, %s179
      %p183 = scmp.eq.s32.totalorder %s17, 0
      %p184 = por %p182, %p183
      %p185 = scmp.ne.s32.totalorder %s177, %s179
      %p186 = scmp.eq.s32.totalorder %s22, 1
      %p187 = por %p185, %p186
      %p188 = scmp.ne.s32.totalorder %s179, %s180
      %p189 = scmp.eq.s32.totalorder %s22, 0
      %p190 = por %p188, %p189
      %p191 = scmp.ne.s32.totalorder %s179, %s180
      %p192 = scmp.eq.s32.totalorder %s23, 1
      %p193 = por %p191, %p192
      %p195 = scmp.ne.s32.totalorder %s180, %s194
      %p196 = scmp.eq.s32.totalorder %s23, 0
      %p197 = por %p195, %p196
      %s198 = ssub.s32 %s17, %s24
      %p199 = scmp.eq.s32.totalorder %s198, 0
      %s201 = sadd.s32 %s200, 1
      %s202 = scalar_select %p199, %s200, %s201
      %p205 = pneg %p199
      %p206 = scmp.eq.s32.totalorder %s17, 1
      %p207 = por %p205, %p206
      %p208 = scmp.ne.s32.totalorder %s200, %s203
      %p209 = scmp.eq.s32.totalorder %s17, 0
      %p210 = por %p208, %p209
      %p211 = scmp.ne.s32.totalorder %s200, %s203
      %p212 = scmp.eq.s32.totalorder %s22, 1
      %p213 = por %p211, %p212
      %p214 = scmp.ne.s32.totalorder %s203, %s204
      %p215 = scmp.eq.s32.totalorder %s22, 0
      %p216 = por %p214, %p215
      %p217 = scmp.ne.s32.totalorder %s203, %s204
      %p218 = scmp.eq.s32.totalorder %s23, 1
      %p219 = por %p217, %p218
      %p221 = scmp.ne.s32.totalorder %s204, %s220
      %p222 = scmp.eq.s32.totalorder %s23, 0
      %p223 = por %p221, %p222
      %p224 = scmp.le.s32.totalorder 1, %s17
      %p225 = scmp.lt.s32.totalorder %s17, 3
      %p226 = pnand %p224, %p225
      %p227 = pneg %p226
      // Predicated region
      $region9: #{shuffle_unit_forward.1} parent=5 // pred_check
        _
      $region10: #{shuffle_unit_forward.1} parent=5 // pred_check_branch
        %229 = sbr.rel (%p226) target = $region12
      $region11: #{shuffle_unit_forward.1} parent=5 // pred_region
        %s230 = ssub.s32 %s17, 1
        // Predicated region
        $region13: #{shuffle_unit_forward.1} parent=11 // pred_check
          %p231 = pneg %p64
        $region14: #{shuffle_unit_forward.1} parent=11 // pred_check_branch
          %233 = sbr.rel (%p231) target = $region16
        $region15: #{shuffle_unit_forward.1} parent=11 // pred_region
          _
        $region16: #{shuffle_unit_forward.1} parent=11 // pred_fallthru
          _
        // Predicated region
        $region17: #{shuffle_unit_forward.1} parent=11 // pred_check
          %p234 = pneg %p85
        $region18: #{shuffle_unit_forward.1} parent=11 // pred_check_branch
          %236 = sbr.rel (%p234) target = $region20
        $region19: #{shuffle_unit_forward.1} parent=11 // pred_region
          _
        $region20: #{shuffle_unit_forward.1} parent=11 // pred_fallthru
          _
        // Predicated region
        $region21: #{shuffle_unit_forward.1} parent=11 // pred_check
          %p237 = pneg %p106
        $region22: #{shuffle_unit_forward.1} parent=11 // pred_check_branch
          %239 = sbr.rel (%p237) target = $region24
        $region23: #{shuffle_unit_forward.1} parent=11 // pred_region
          _
        $region24: #{shuffle_unit_forward.1} parent=11 // pred_fallthru
          _
        // Predicated region
        $region25: #{shuffle_unit_forward.1} parent=11 // pred_check
          %p240 = pneg %p127
        $region26: #{shuffle_unit_forward.1} parent=11 // pred_check_branch
          %242 = sbr.rel (%p240) target = $region28
        $region27: #{shuffle_unit_forward.1} parent=11 // pred_region
          _
        $region28: #{shuffle_unit_forward.1} parent=11 // pred_fallthru
          _
        // Predicated region
        $region29: #{shuffle_unit_forward.1} parent=11 // pred_check
          %p243 = pneg %p148
        $region30: #{shuffle_unit_forward.1} parent=11 // pred_check_branch
          %245 = sbr.rel (%p243) target = $region32
        $region31: #{shuffle_unit_forward.1} parent=11 // pred_region
          _
        $region32: #{shuffle_unit_forward.1} parent=11 // pred_fallthru
          _
        // Predicated region
        $region33: #{shuffle_unit_forward.1} parent=11 // pred_check
          %p246 = pneg %p169
        $region34: #{shuffle_unit_forward.1} parent=11 // pred_check_branch
          %248 = sbr.rel (%p246) target = $region36
        $region35: #{shuffle_unit_forward.1} parent=11 // pred_region
          _
        $region36: #{shuffle_unit_forward.1} parent=11 // pred_fallthru
          _
        // Predicated region
        $region37: #{shuffle_unit_forward.1} parent=11 // pred_check
          %p249 = pneg %p190
        $region38: #{shuffle_unit_forward.1} parent=11 // pred_check_branch
          %251 = sbr.rel (%p249) target = $region40
        $region39: #{shuffle_unit_forward.1} parent=11 // pred_region
          _
        $region40: #{shuffle_unit_forward.1} parent=11 // pred_fallthru
          _
      $region12: #{shuffle_unit_forward.1} parent=5 // pred_fallthru
        _
      %p252 = scmp.lt.s32.totalorder %s17, 2
      // Predicated region
      $region41: #{shuffle_unit_forward.1} parent=5 // pred_check
        %p253 = pneg %p252
      $region42: #{shuffle_unit_forward.1} parent=5 // pred_check_branch
        %255 = sbr.rel (%p253) target = $region44
      $region43: #{shuffle_unit_forward.1} parent=5 // pred_region
        // Predicated region
        $region45: #{shuffle_unit_forward.1} parent=43 // pred_check
          %p256 = pneg %p37
        $region46: #{shuffle_unit_forward.1} parent=43 // pred_check_branch
          %258 = sbr.rel (%p256) target = $region48
        $region47: #{shuffle_unit_forward.1} parent=43 // pred_region
          %p259 = scmp.lt.s32.totalorder %s17, 1
          %s260 = scalar_select %p259, %s17, 1
          %s261 = smul.addr %s260, 32
          %s262 = smul.addr %s261, 8
          %s263 = scalar_lea.vmem %s0, %s262
        $region48: #{shuffle_unit_forward.1} parent=43 // pred_fallthru
          _
      $region44: #{shuffle_unit_forward.1} parent=5 // pred_fallthru
        _
      %p264 = scmp.le.s32.totalorder 1, %s17
      %p265 = scmp.lt.s32.totalorder %s17, 3
      %p266 = pnand %p264, %p265
      %p267 = pneg %p266
      // Predicated region
      $region49: #{shuffle_unit_forward.1} parent=5 // pred_check
        _
      $region50: #{shuffle_unit_forward.1} parent=5 // pred_check_branch
        %269 = sbr.rel (%p266) target = $region52
      $region51: #{shuffle_unit_forward.1} parent=5 // pred_region
        %s270 = ssub.s32 %s17, 1
        %p271 = scmp.lt.s32.totalorder %s22, 1
        %s272 = scalar_select %p271, %s22, 1
        %s273 = smul.addr %s272, 32
        %s274 = smul.addr %s273, 8
        %s275 = scalar_lea.vmem %s0, %s274
        %p276 = pneg %p43
        %p277 = pneg %p40
        %p278 = pneg %p64
        %p279 = pneg %p61
        %p280 = pneg %p85
        %p281 = pneg %p82
        %p282 = pneg %p106
        %p283 = pneg %p103
        %p284 = pneg %p127
        %p285 = pneg %p124
        %p286 = pneg %p148
        %p287 = pneg %p145
        %p288 = pneg %p169
        %p289 = pneg %p166
        %p290 = pneg %p190
        %p291 = pneg %p187
        %p292 = pneg %p216
        %p293 = pneg %p213
        %s294 = sand.u32 %s203, 1
        %s295 = scalar_lea.sflag [#allocation4], %s294
        %s296 = sand.u32 %s203, 1
        %s297 = smul.addr %s296, 256
        %s298 = scalar_lea.vmem [#allocation3], %s297
        %p299 = scmp.lt.s32.totalorder %s22, 1
        %s300 = scalar_select %p299, %s22, 1
        %s301 = smul.addr %s300, 32
        %s302 = smul.addr %s301, 8
        %s303 = scalar_lea.vmem %s0, %s302
        %v304 = vld [vmem:[%s303] sm:$0xff]
        %v305 = vld [vmem:[%s303 + $0x8] sm:$0xff]
        %v306 = vld [vmem:[%s303 + $0x10] sm:$0xff]
        %v307 = vld [vmem:[%s303 + $0x18] sm:$0xff]
        %v308 = vld [vmem:[%s303 + $0x20] sm:$0xff]
        %v309 = vld [vmem:[%s303 + $0x28] sm:$0xff]
        %v310 = vld [vmem:[%s303 + $0x30] sm:$0xff]
        %v311 = vld [vmem:[%s303 + $0x38] sm:$0xff]
        %v312 = vld [vmem:[%s303 + $0x40] sm:$0xff]
        %v313 = vld [vmem:[%s303 + $0x48] sm:$0xff]
        %v314 = vld [vmem:[%s303 + $0x50] sm:$0xff]
        %v315 = vld [vmem:[%s303 + $0x58] sm:$0xff]
        %v316 = vld [vmem:[%s303 + $0x60] sm:$0xff]
        %v317 = vld [vmem:[%s303 + $0x68] sm:$0xff]
        %v318 = vld [vmem:[%s303 + $0x70] sm:$0xff]
        %v319 = vld [vmem:[%s303 + $0x78] sm:$0xff]
        %v320 = vld [vmem:[%s303 + $0x80] sm:$0xff]
        %v321 = vld [vmem:[%s303 + $0x88] sm:$0xff]
        %v322 = vld [vmem:[%s303 + $0x90] sm:$0xff]
        %v323 = vld [vmem:[%s303 + $0x98] sm:$0xff]
        %v324 = vld [vmem:[%s303 + $0xa0] sm:$0xff]
        %v325 = vld [vmem:[%s303 + $0xa8] sm:$0xff]
        %v326 = vld [vmem:[%s303 + $0xb0] sm:$0xff]
        %v327 = vld [vmem:[%s303 + $0xb8] sm:$0xff]
        %v328 = vld [vmem:[%s303 + $0xc0] sm:$0xff]
        %v329 = vld [vmem:[%s303 + $0xc8] sm:$0xff]
        %v330 = vld [vmem:[%s303 + $0xd0] sm:$0xff]
        %v331 = vld [vmem:[%s303 + $0xd8] sm:$0xff]
        %v332 = vld [vmem:[%s303 + $0xe0] sm:$0xff]
        %v333 = vld [vmem:[%s303 + $0xe8] sm:$0xff]
        %v334 = vld [vmem:[%s303 + $0xf0] sm:$0xff]
        %v335 = vld [vmem:[%s303 + $0xf8] sm:$0xff]
        %v336 = vld [vmem:[%s1] sm:$0xff]
        %v337 = vld [vmem:[%s1 + $0x8] sm:$0xff]
        %v338 = vld [vmem:[%s1 + $0x10] sm:$0xff]
        %v339 = vld [vmem:[%s1 + $0x18] sm:$0xff]
        %v340 = vld [vmem:[%s2] sm:$0x1]
        %v342 = vlaneseq
        %v343 = vshrl.u32 %v342, 7
        %v344 = vsub.s32 0, %v343
        %v345 = vrot.slane %v340, %v344
        %vm347 = vcmask 261120
        %v349 = vsel %vm347, %v304, 0
        %v352 = vsel %vm347, %v305, 0
        %v355 = vsel %vm347, %v306, 0
        %v358 = vsel %vm347, %v307, 0
        %v361 = vsel %vm347, %v308, 0
        %v364 = vsel %vm347, %v309, 0
        %v367 = vsel %vm347, %v310, 0
        %v370 = vsel %vm347, %v311, 0
        %v373 = vsel %vm347, %v312, 0
        %v376 = vsel %vm347, %v313, 0
        %v379 = vsel %vm347, %v314, 0
        %v382 = vsel %vm347, %v315, 0
        %v385 = vsel %vm347, %v316, 0
        %v388 = vsel %vm347, %v317, 0
        %v391 = vsel %vm347, %v318, 0
        %v394 = vsel %vm347, %v319, 0
        %v397 = vsel %vm347, %v320, 0
        %v400 = vsel %vm347, %v321, 0
        %v403 = vsel %vm347, %v322, 0
        %v406 = vsel %vm347, %v323, 0
        %v409 = vsel %vm347, %v324, 0
        %v412 = vsel %vm347, %v325, 0
        %v415 = vsel %vm347, %v326, 0
        %v418 = vsel %vm347, %v327, 0
        %v421 = vsel %vm347, %v328, 0
        %v424 = vsel %vm347, %v329, 0
        %v427 = vsel %vm347, %v330, 0
        %v430 = vsel %vm347, %v331, 0
        %v433 = vsel %vm347, %v332, 0
        %v436 = vsel %vm347, %v333, 0
        %v439 = vsel %vm347, %v334, 0
        %v442 = vsel %vm347, %v335, 0
        %444 = vmatprep.subr.mxu0 0.0
        %445 = vmatpush1.msra.mxu0 %v336
        %446 = vmatprep.subr.mxu0 0.0
        %447 = vmatpush1.msra.mxu0 %v337
        %448 = vmatprep.subr.mxu0 0.0
        %449 = vmatpush1.msra.mxu0 %v338
        %450 = vmatprep.subr.mxu0 0.0
        %451 = vmatpush1.msra.mxu0 %v339
        %452 = vmatprep.subr.mxu0 0.0
        %453 = vmatpush1.msra.mxu0 0.0
        %454 = vmatprep.subr.mxu0 0.0
        %455 = vmatpush1.msra.mxu0 0.0
        %456 = vmatprep.subr.mxu0 0.0
        %457 = vmatpush1.msra.mxu0 0.0
        %458 = vmatprep.subr.mxu0 0.0
        %459 = vmatpush1.msra.mxu0 0.0
        %460 = vmatprep.subr.mxu0 0.0
        %461 = vmatpush1.msra.mxu0 0.0
        %462 = vmatprep.subr.mxu0 0.0
        %463 = vmatpush1.msra.mxu0 0.0
        %464 = vmatprep.subr.mxu0 0.0
        %465 = vmatpush1.msra.mxu0 0.0
        %466 = vmatprep.subr.mxu0 0.0
        %467 = vmatpush1.msra.mxu0 0.0
        %468 = vmatprep.subr.mxu0 0.0
        %469 = vmatpush1.msra.mxu0 0.0
        %470 = vmatprep.subr.mxu0 0.0
        %471 = vmatpush1.msra.mxu0 0.0
        %472 = vmatprep.subr.mxu0 0.0
        %473 = vmatpush1.msra.mxu0 0.0
        %474 = vmatprep.subr.mxu0 0.0
        %475 = vmatpush1.msra.mxu0 0.0
        %476 = vmatprep.subr.mxu0 0.0
        %477 = vmatpush1.msra.mxu0 0.0
        %478 = vmatprep.subr.mxu0 0.0
        %479 = vmatpush1.msra.mxu0 0.0
        %480 = vmatprep.subr.mxu0 0.0
        %481 = vmatpush1.msra.mxu0 0.0
        %482 = vmatprep.subr.mxu0 0.0
        %483 = vmatpush1.msra.mxu0 0.0
        %484 = vmatprep.subr.mxu0 0.0
        %485 = vmatpush1.msra.mxu0 0.0
        %486 = vmatprep.subr.mxu0 0.0
        %487 = vmatpush1.msra.mxu0 0.0
        %488 = vmatprep.subr.mxu0 0.0
        %489 = vmatpush1.msra.mxu0 0.0
        %490 = vmatprep.subr.mxu0 0.0
        %491 = vmatpush1.msra.mxu0 0.0
        %492 = vmatprep.subr.mxu0 0.0
        %493 = vmatpush1.msra.mxu0 0.0
        %494 = vmatprep.subr.mxu0 0.0
        %495 = vmatpush1.msra.mxu0 0.0
        %496 = vmatprep.subr.mxu0 0.0
        %497 = vmatpush1.msra.mxu0 0.0
        %498 = vmatprep.subr.mxu0 0.0
        %499 = vmatpush1.msra.mxu0 0.0
        %500 = vmatprep.subr.mxu0 0.0
        %501 = vmatpush1.msra.mxu0 0.0
        %502 = vmatprep.subr.mxu0 0.0
        %503 = vmatpush1.msra.mxu0 0.0
        %504 = vmatprep.subr.mxu0 0.0
        %505 = vmatpush1.msra.mxu0 0.0
        %506 = vmatprep.subr.mxu0 0.0
        %507 = vmatpush1.msra.mxu0 0.0
        %508 = vmatprep.mubr.f32.mxu0 0.0
        %509 = vmatmul.mubr.f32.gmra.mrb[0].mxu0 %v349
        %v510 = vpop.f32.mrb[0].mxu0
        %v511 = vadd.f32 %v345, %v510
        %v512 = vpop.f32.mrb[0].mxu0
        %513 = vmatprep.mubr.f32.mxu0 0.0
        %514 = vmatmul.mubr.f32.gmra.mrb[0].mxu0 %v352
        %v515 = vpop.f32.mrb[0].mxu0
        %v516 = vadd.f32 %v345, %v515
        %v517 = vpop.f32.mrb[0].mxu0
        %518 = vmatprep.mubr.f32.mxu0 0.0
        %519 = vmatmul.mubr.f32.gmra.mrb[0].mxu0 %v355
        %v520 = vpop.f32.mrb[0].mxu0
        %v521 = vadd.f32 %v345, %v520
        %v522 = vpop.f32.mrb[0].mxu0
        %523 = vmatprep.mubr.f32.mxu0 0.0
        %524 = vmatmul.mubr.f32.gmra.mrb[0].mxu0 %v358
        %v525 = vpop.f32.mrb[0].mxu0
        %v526 = vadd.f32 %v345, %v525
        %v527 = vpop.f32.mrb[0].mxu0
        %528 = vmatprep.mubr.f32.mxu0 0.0
        %529 = vmatmul.mubr.f32.gmra.mrb[0].mxu0 %v361
        %v530 = vpop.f32.mrb[0].mxu0
        %v531 = vadd.f32 %v345, %v530
        %v532 = vpop.f32.mrb[0].mxu0
        %533 = vmatprep.mubr.f32.mxu0 0.0
        %534 = vmatmul.mubr.f32.gmra.mrb[0].mxu0 %v364
        %v535 = vpop.f32.mrb[0].mxu0
        %v536 = vadd.f32 %v345, %v535
        %v537 = vpop.f32.mrb[0].mxu0
        %538 = vmatprep.mubr.f32.mxu0 0.0
        %539 = vmatmul.mubr.f32.gmra.mrb[0].mxu0 %v367
        %v540 = vpop.f32.mrb[0].mxu0
        %v541 = vadd.f32 %v345, %v540
        %v542 = vpop.f32.mrb[0].mxu0
        %543 = vmatprep.mubr.f32.mxu0 0.0
        %544 = vmatmul.mubr.f32.gmra.mrb[0].mxu0 %v370
        %v545 = vpop.f32.mrb[0].mxu0
        %v546 = vadd.f32 %v345, %v545
        %v547 = vpop.f32.mrb[0].mxu0
        %548 = vmatprep.mubr.f32.mxu0 0.0
        %549 = vmatmul.mubr.f32.gmra.mrb[0].mxu0 %v373
        %v550 = vpop.f32.mrb[0].mxu0
        %v551 = vadd.f32 %v345, %v550
        %v552 = vpop.f32.mrb[0].mxu0
        %553 = vmatprep.mubr.f32.mxu0 0.0
        %554 = vmatmul.mubr.f32.gmra.mrb[0].mxu0 %v376
        %v555 = vpop.f32.mrb[0].mxu0
        %v556 = vadd.f32 %v345, %v555
        %v557 = vpop.f32.mrb[0].mxu0
        %558 = vmatprep.mubr.f32.mxu0 0.0
        %559 = vmatmul.mubr.f32.gmra.mrb[0].mxu0 %v379
        %v560 = vpop.f32.mrb[0].mxu0
        %v561 = vadd.f32 %v345, %v560
        %v562 = vpop.f32.mrb[0].mxu0
        %563 = vmatprep.mubr.f32.mxu0 0.0
        %564 = vmatmul.mubr.f32.gmra.mrb[0].mxu0 %v382
        %v565 = vpop.f32.mrb[0].mxu0
        %v566 = vadd.f32 %v345, %v565
        %v567 = vpop.f32.mrb[0].mxu0
        %568 = vmatprep.mubr.f32.mxu0 0.0
        %569 = vmatmul.mubr.f32.gmra.mrb[0].mxu0 %v385
        %v570 = vpop.f32.mrb[0].mxu0
        %v571 = vadd.f32 %v345, %v570
        %v572 = vpop.f32.mrb[0].mxu0
        %573 = vmatprep.mubr.f32.mxu0 0.0
        %574 = vmatmul.mubr.f32.gmra.mrb[0].mxu0 %v388
        %v575 = vpop.f32.mrb[0].mxu0
        %v576 = vadd.f32 %v345, %v575
        %v577 = vpop.f32.mrb[0].mxu0
        %578 = vmatprep.mubr.f32.mxu0 0.0
        %579 = vmatmul.mubr.f32.gmra.mrb[0].mxu0 %v391
        %v580 = vpop.f32.mrb[0].mxu0
        %v581 = vadd.f32 %v345, %v580
        %v582 = vpop.f32.mrb[0].mxu0
        %583 = vmatprep.mubr.f32.mxu0 0.0
        %584 = vmatmul.mubr.f32.gmra.mrb[0].mxu0 %v394
        %v585 = vpop.f32.mrb[0].mxu0
        %v586 = vadd.f32 %v345, %v585
        %v587 = vpop.f32.mrb[0].mxu0
        %588 = vmatprep.mubr.f32.mxu0 0.0
        %589 = vmatmul.mubr.f32.gmra.mrb[0].mxu0 %v397
        %v590 = vpop.f32.mrb[0].mxu0
        %v591 = vadd.f32 %v345, %v590
        %v592 = vpop.f32.mrb[0].mxu0
        %593 = vmatprep.mubr.f32.mxu0 0.0
        %594 = vmatmul.mubr.f32.gmra.mrb[0].mxu0 %v400
        %v595 = vpop.f32.mrb[0].mxu0
        %v596 = vadd.f32 %v345, %v595
        %v597 = vpop.f32.mrb[0].mxu0
        %598 = vmatprep.mubr.f32.mxu0 0.0
        %599 = vmatmul.mubr.f32.gmra.mrb[0].mxu0 %v403
        %v600 = vpop.f32.mrb[0].mxu0
        %v601 = vadd.f32 %v345, %v600
        %v602 = vpop.f32.mrb[0].mxu0
        %603 = vmatprep.mubr.f32.mxu0 0.0
        %604 = vmatmul.mubr.f32.gmra.mrb[0].mxu0 %v406
        %v605 = vpop.f32.mrb[0].mxu0
        %v606 = vadd.f32 %v345, %v605
        %v607 = vpop.f32.mrb[0].mxu0
        %608 = vmatprep.mubr.f32.mxu0 0.0
        %609 = vmatmul.mubr.f32.gmra.mrb[0].mxu0 %v409
        %v610 = vpop.f32.mrb[0].mxu0
        %v611 = vadd.f32 %v345, %v610
        %v612 = vpop.f32.mrb[0].mxu0
        %613 = vmatprep.mubr.f32.mxu0 0.0
        %614 = vmatmul.mubr.f32.gmra.mrb[0].mxu0 %v412
        %v615 = vpop.f32.mrb[0].mxu0
        %v616 = vadd.f32 %v345, %v615
        %v617 = vpop.f32.mrb[0].mxu0
        %618 = vmatprep.mubr.f32.mxu0 0.0
        %619 = vmatmul.mubr.f32.gmra.mrb[0].mxu0 %v415
        %v620 = vpop.f32.mrb[0].mxu0
        %v621 = vadd.f32 %v345, %v620
        %v622 = vpop.f32.mrb[0].mxu0
        %623 = vmatprep.mubr.f32.mxu0 0.0
        %624 = vmatmul.mubr.f32.gmra.mrb[0].mxu0 %v418
        %v625 = vpop.f32.mrb[0].mxu0
        %v626 = vadd.f32 %v345, %v625
        %v627 = vpop.f32.mrb[0].mxu0
        %628 = vmatprep.mubr.f32.mxu0 0.0
        %629 = vmatmul.mubr.f32.gmra.mrb[0].mxu0 %v421
        %v630 = vpop.f32.mrb[0].mxu0
        %v631 = vadd.f32 %v345, %v630
        %v632 = vpop.f32.mrb[0].mxu0
        %633 = vmatprep.mubr.f32.mxu0 0.0
        %634 = vmatmul.mubr.f32.gmra.mrb[0].mxu0 %v424
        %v635 = vpop.f32.mrb[0].mxu0
        %v636 = vadd.f32 %v345, %v635
        %v637 = vpop.f32.mrb[0].mxu0
        %638 = vmatprep.mubr.f32.mxu0 0.0
        %639 = vmatmul.mubr.f32.gmra.mrb[0].mxu0 %v427
        %v640 = vpop.f32.mrb[0].mxu0
        %v641 = vadd.f32 %v345, %v640
        %v642 = vpop.f32.mrb[0].mxu0
        %643 = vmatprep.mubr.f32.mxu0 0.0
        %644 = vmatmul.mubr.f32.gmra.mrb[0].mxu0 %v430
        %v645 = vpop.f32.mrb[0].mxu0
        %v646 = vadd.f32 %v345, %v645
        %v647 = vpop.f32.mrb[0].mxu0
        %648 = vmatprep.mubr.f32.mxu0 0.0
        %649 = vmatmul.mubr.f32.gmra.mrb[0].mxu0 %v433
        %v650 = vpop.f32.mrb[0].mxu0
        %v651 = vadd.f32 %v345, %v650
        %v652 = vpop.f32.mrb[0].mxu0
        %653 = vmatprep.mubr.f32.mxu0 0.0
        %654 = vmatmul.mubr.f32.gmra.mrb[0].mxu0 %v436
        %v655 = vpop.f32.mrb[0].mxu0
        %v656 = vadd.f32 %v345, %v655
        %v657 = vpop.f32.mrb[0].mxu0
        %658 = vmatprep.mubr.f32.mxu0 0.0
        %659 = vmatmul.mubr.f32.gmra.mrb[0].mxu0 %v439
        %v660 = vpop.f32.mrb[0].mxu0
        %v661 = vadd.f32 %v345, %v660
        %v662 = vpop.f32.mrb[0].mxu0
        %663 = vmatprep.mubr.f32.mxu0 0.0
        %664 = vmatmul.mubr.f32.gmra.mrb[0].mxu0 %v442
        %v665 = vpop.f32.mrb[0].mxu0
        %v666 = vadd.f32 %v345, %v665
        %v667 = vpop.f32.mrb[0].mxu0
        %668 = vdwg.mxu0
        %v669 = vmax.f32 %v511, 0.0
        %v670 = vmax.f32 %v516, 0.0
        %v671 = vmax.f32 %v521, 0.0
        %v672 = vmax.f32 %v526, 0.0
        %v673 = vmax.f32 %v531, 0.0
        %v674 = vmax.f32 %v536, 0.0
        %v675 = vmax.f32 %v541, 0.0
        %v676 = vmax.f32 %v546, 0.0
        %v677 = vmax.f32 %v551, 0.0
        %v678 = vmax.f32 %v556, 0.0
        %v679 = vmax.f32 %v561, 0.0
        %v680 = vmax.f32 %v566, 0.0
        %v681 = vmax.f32 %v571, 0.0
        %v682 = vmax.f32 %v576, 0.0
        %v683 = vmax.f32 %v581, 0.0
        %v684 = vmax.f32 %v586, 0.0
        %v685 = vmax.f32 %v591, 0.0
        %v686 = vmax.f32 %v596, 0.0
        %v687 = vmax.f32 %v601, 0.0
        %v688 = vmax.f32 %v606, 0.0
        %v689 = vmax.f32 %v611, 0.0
        %v690 = vmax.f32 %v616, 0.0
        %v691 = vmax.f32 %v621, 0.0
        %v692 = vmax.f32 %v626, 0.0
        %v693 = vmax.f32 %v631, 0.0
        %v694 = vmax.f32 %v636, 0.0
        %v695 = vmax.f32 %v641, 0.0
        %v696 = vmax.f32 %v646, 0.0
        %v697 = vmax.f32 %v651, 0.0
        %v698 = vmax.f32 %v656, 0.0
        %v699 = vmax.f32 %v661, 0.0
        %v700 = vmax.f32 %v666, 0.0
        %v701 = vld [vmem:[%s3] sm:$0xff]
        %v702 = vld [vmem:[%s3 + $0x8] sm:$0x1]
        %v703 = vld [vmem:[%s4] sm:$0x1]
        %vm704 = vcmask 130048
        %705 = vst.msk [vmem:[#allocation2] sm:$0xff] %vm704, 0.0
        %706 = vst.msk [vmem:[#allocation2 + $0x8] sm:$0xff] %vm704, 0.0
        %707 = vst.msk [vmem:[#allocation2 + $0x10] sm:$0xff] %vm704, 0.0
        %708 = vst.msk [vmem:[#allocation2 + $0x18] sm:$0xff] %vm704, 0.0
        %709 = vst.msk [vmem:[#allocation2 + $0x20] sm:$0xff] %vm704, 0.0
        %710 = vst.msk [vmem:[#allocation2 + $0x28] sm:$0xff] %vm704, 0.0
        %711 = vst.msk [vmem:[#allocation2 + $0x30] sm:$0xff] %vm704, 0.0
        %712 = vst.msk [vmem:[#allocation2 + $0x38] sm:$0xff] %vm704, 0.0
        %713 = vst.msk [vmem:[#allocation2 + $0x40] sm:$0xff] %vm704, 0.0
        %714 = vst.msk [vmem:[#allocation2 + $0x48] sm:$0xff] %vm704, 0.0
        %715 = vst.msk [vmem:[#allocation2 + $0x50] sm:$0xff] %vm704, 0.0
        %716 = vst.msk [vmem:[#allocation2 + $0x58] sm:$0xff] %vm704, 0.0
        %717 = vst.msk [vmem:[#allocation2 + $0x60] sm:$0xff] %vm704, 0.0
        %718 = vst.msk [vmem:[#allocation2 + $0x68] sm:$0xff] %vm704, 0.0
        %719 = vst.msk [vmem:[#allocation2 + $0x70] sm:$0xff] %vm704, 0.0
        %720 = vst.msk [vmem:[#allocation2 + $0x78] sm:$0xff] %vm704, 0.0
        %721 = vst.msk [vmem:[#allocation2 + $0x80] sm:$0xff] %vm704, 0.0
        %722 = vst.msk [vmem:[#allocation2 + $0x88] sm:$0xff] %vm704, 0.0
        %723 = vst.msk [vmem:[#allocation2 + $0x90] sm:$0xff] %vm704, 0.0
        %724 = vst.msk [vmem:[#allocation2 + $0x98] sm:$0xff] %vm704, 0.0
        %725 = vst.msk [vmem:[#allocation2 + $0xa0] sm:$0xff] %vm704, 0.0
        %726 = vst.msk [vmem:[#allocation2 + $0xa8] sm:$0xff] %vm704, 0.0
        %727 = vst.msk [vmem:[#allocation2 + $0xb0] sm:$0xff] %vm704, 0.0
        %728 = vst.msk [vmem:[#allocation2 + $0xb8] sm:$0xff] %vm704, 0.0
        %729 = vst.msk [vmem:[#allocation2 + $0xc0] sm:$0xff] %vm704, 0.0
        %730 = vst.msk [vmem:[#allocation2 + $0xc8] sm:$0xff] %vm704, 0.0
        %731 = vst.msk [vmem:[#allocation2 + $0xd0] sm:$0xff] %vm704, 0.0
        %732 = vst.msk [vmem:[#allocation2 + $0xd8] sm:$0xff] %vm704, 0.0
        %733 = vst.msk [vmem:[#allocation2 + $0xe0] sm:$0xff] %vm704, 0.0
        %734 = vst.msk [vmem:[#allocation2 + $0xe8] sm:$0xff] %vm704, 0.0
        %735 = vst.msk [vmem:[#allocation2 + $0xf0] sm:$0xff] %vm704, 0.0
        %736 = vst.msk [vmem:[#allocation2 + $0xf8] sm:$0xff] %vm704, 0.0
        %737 = vst.msk [vmem:[#allocation2 + $0x100] sm:$0xff] %vm704, 0.0
        %738 = vst.msk [vmem:[#allocation2 + $0x108] sm:$0xff] %vm704, 0.0
        %739 = vst.msk [vmem:[#allocation2 + $0x110] sm:$0xff] %vm704, 0.0
        %740 = vst.msk [vmem:[#allocation2 + $0x118] sm:$0xff] %vm704, 0.0
        %741 = vst.msk [vmem:[#allocation2 + $0x120] sm:$0xff] %vm704, 0.0
        %742 = vst.msk [vmem:[#allocation2 + $0x128] sm:$0xff] %vm704, 0.0
        %743 = vst.msk [vmem:[#allocation2 + $0x130] sm:$0xff] %vm704, 0.0
        %744 = vst.msk [vmem:[#allocation2 + $0x138] sm:$0xff] %vm704, 0.0
        %745 = vst.msk [vmem:[#allocation2 + $0x140] sm:$0xff] %vm704, 0.0
        %746 = vst.msk [vmem:[#allocation2 + $0x148] sm:$0xff] %vm704, 0.0
        %747 = vst.msk [vmem:[#allocation2 + $0x150] sm:$0xff] %vm704, 0.0
        %748 = vst.msk [vmem:[#allocation2 + $0x158] sm:$0xff] %vm704, 0.0
        %749 = vst.msk [vmem:[#allocation2 + $0x160] sm:$0xff] %vm704, 0.0
        %750 = vst.msk [vmem:[#allocation2 + $0x168] sm:$0xff] %vm704, 0.0
        %751 = vst.msk [vmem:[#allocation2 + $0x170] sm:$0xff] %vm704, 0.0
        %752 = vst.msk [vmem:[#allocation2 + $0x178] sm:$0xff] %vm704, 0.0
        %753 = vst.msk [vmem:[#allocation2 + $0x180] sm:$0xff] %vm704, 0.0
        %754 = vst.msk [vmem:[#allocation2 + $0x188] sm:$0xff] %vm704, 0.0
        %755 = vst.msk [vmem:[#allocation2 + $0x190] sm:$0xff] %vm704, 0.0
        %756 = vst.msk [vmem:[#allocation2 + $0x198] sm:$0xff] %vm704, 0.0
        %757 = vst.msk [vmem:[#allocation2 + $0x1a0] sm:$0xff] %vm704, 0.0
        %758 = vst.msk [vmem:[#allocation2 + $0x1a8] sm:$0xff] %vm704, 0.0
        %759 = vst.msk [vmem:[#allocation2 + $0x1b0] sm:$0xff] %vm704, 0.0
        %760 = vst.msk [vmem:[#allocation2 + $0x1b8] sm:$0xff] %vm704, 0.0
        %761 = vst.msk [vmem:[#allocation2 + $0x1c0] sm:$0xff] %vm704, 0.0
        %762 = vst.msk [vmem:[#allocation2 + $0x1c8] sm:$0xff] %vm704, 0.0
        %763 = vst.msk [vmem:[#allocation2 + $0x1d0] sm:$0xff] %vm704, 0.0
        %764 = vst.msk [vmem:[#allocation2 + $0x1d8] sm:$0xff] %vm704, 0.0
        %765 = vst.msk [vmem:[#allocation2 + $0x1e0] sm:$0xff] %vm704, 0.0
        %766 = vst.msk [vmem:[#allocation2 + $0x1e8] sm:$0xff] %vm704, 0.0
        %767 = vst.msk [vmem:[#allocation2 + $0x1f0] sm:$0xff] %vm704, 0.0
        %768 = vst.msk [vmem:[#allocation2 + $0x1f8] sm:$0xff] %vm704, 0.0
        %769 = vst.msk [vmem:[#allocation2 + $0x200] sm:$0xff] %vm704, 0.0
        %770 = vst.msk [vmem:[#allocation2 + $0x208] sm:$0xff] %vm704, 0.0
        %771 = vst.msk [vmem:[#allocation2 + $0x210] sm:$0xff] %vm704, 0.0
        %772 = vst.msk [vmem:[#allocation2 + $0x218] sm:$0xff] %vm704, 0.0
        %773 = vst.msk [vmem:[#allocation2 + $0x220] sm:$0xff] %vm704, 0.0
        %774 = vst.msk [vmem:[#allocation2 + $0x228] sm:$0xff] %vm704, 0.0
        %775 = vst.msk [vmem:[#allocation2 + $0x230] sm:$0xff] %vm704, 0.0
        %776 = vst.msk [vmem:[#allocation2 + $0x238] sm:$0xff] %vm704, 0.0
        %s777 = scalar_lea.vmem [#allocation2], 32
        %778 = vst.msk [vmem:[%s777 + $0x8] sm:$0xff] %vm704, %v669
        %779 = vst.msk [vmem:[%s777 + $0x10] sm:$0xff] %vm704, %v670
        %780 = vst.msk [vmem:[%s777 + $0x28] sm:$0xff] %vm704, %v671
        %781 = vst.msk [vmem:[%s777 + $0x30] sm:$0xff] %vm704, %v672
        %782 = vst.msk [vmem:[%s777 + $0x48] sm:$0xff] %vm704, %v673
        %783 = vst.msk [vmem:[%s777 + $0x50] sm:$0xff] %vm704, %v674
        %784 = vst.msk [vmem:[%s777 + $0x68] sm:$0xff] %vm704, %v675
        %785 = vst.msk [vmem:[%s777 + $0x70] sm:$0xff] %vm704, %v676
        %786 = vst.msk [vmem:[%s777 + $0x88] sm:$0xff] %vm704, %v677
        %787 = vst.msk [vmem:[%s777 + $0x90] sm:$0xff] %vm704, %v678
        %788 = vst.msk [vmem:[%s777 + $0xa8] sm:$0xff] %vm704, %v679
        %789 = vst.msk [vmem:[%s777 + $0xb0] sm:$0xff] %vm704, %v680
        %790 = vst.msk [vmem:[%s777 + $0xc8] sm:$0xff] %vm704, %v681
        %791 = vst.msk [vmem:[%s777 + $0xd0] sm:$0xff] %vm704, %v682
        %792 = vst.msk [vmem:[%s777 + $0xe8] sm:$0xff] %vm704, %v683
        %793 = vst.msk [vmem:[%s777 + $0xf0] sm:$0xff] %vm704, %v684
        %794 = vst.msk [vmem:[%s777 + $0x108] sm:$0xff] %vm704, %v685
        %795 = vst.msk [vmem:[%s777 + $0x110] sm:$0xff] %vm704, %v686
        %796 = vst.msk [vmem:[%s777 + $0x128] sm:$0xff] %vm704, %v687
        %797 = vst.msk [vmem:[%s777 + $0x130] sm:$0xff] %vm704, %v688
        %798 = vst.msk [vmem:[%s777 + $0x148] sm:$0xff] %vm704, %v689
        %799 = vst.msk [vmem:[%s777 + $0x150] sm:$0xff] %vm704, %v690
        %800 = vst.msk [vmem:[%s777 + $0x168] sm:$0xff] %vm704, %v691
        %801 = vst.msk [vmem:[%s777 + $0x170] sm:$0xff] %vm704, %v692
        %802 = vst.msk [vmem:[%s777 + $0x188] sm:$0xff] %vm704, %v693
        %803 = vst.msk [vmem:[%s777 + $0x190] sm:$0xff] %vm704, %v694
        %804 = vst.msk [vmem:[%s777 + $0x1a8] sm:$0xff] %vm704, %v695
        %805 = vst.msk [vmem:[%s777 + $0x1b0] sm:$0xff] %vm704, %v696
        %806 = vst.msk [vmem:[%s777 + $0x1c8] sm:$0xff] %vm704, %v697
        %807 = vst.msk [vmem:[%s777 + $0x1d0] sm:$0xff] %vm704, %v698
        %808 = vst.msk [vmem:[%s777 + $0x1e8] sm:$0xff] %vm704, %v699
        %809 = vst.msk [vmem:[%s777 + $0x1f0] sm:$0xff] %vm704, %v700
        %v810 = vld [vmem:[#allocation2 + $0x7] sm:$0xff]
        %v811 = vld [vmem:[#allocation2 + $0xf] sm:$0xff]
        %v812 = vld [vmem:[#allocation2 + $0x27] sm:$0xff]
        %v813 = vld [vmem:[#allocation2 + $0x2f] sm:$0xff]
        %v814 = vld [vmem:[#allocation2 + $0x47] sm:$0xff]
        %v815 = vld [vmem:[#allocation2 + $0x4f] sm:$0xff]
        %v816 = vld [vmem:[#allocation2 + $0x67] sm:$0xff]
        %v817 = vld [vmem:[#allocation2 + $0x6f] sm:$0xff]
        %v818 = vld [vmem:[#allocation2 + $0x87] sm:$0xff]
        %v819 = vld [vmem:[#allocation2 + $0x8f] sm:$0xff]
        %v820 = vld [vmem:[#allocation2 + $0xa7] sm:$0xff]
        %v821 = vld [vmem:[#allocation2 + $0xaf] sm:$0xff]
        %v822 = vld [vmem:[#allocation2 + $0xc7] sm:$0xff]
        %v823 = vld [vmem:[#allocation2 + $0xcf] sm:$0xff]
        %v824 = vld [vmem:[#allocation2 + $0xe7] sm:$0xff]
        %v825 = vld [vmem:[#allocation2 + $0xef] sm:$0xff]
        %v826 = vld [vmem:[#allocation2 + $0x107] sm:$0xff]
        %v827 = vld [vmem:[#allocation2 + $0x10f] sm:$0xff]
        %v828 = vld [vmem:[#allocation2 + $0x127] sm:$0xff]
        %v829 = vld [vmem:[#allocation2 + $0x12f] sm:$0xff]
        %v830 = vld [vmem:[#allocation2 + $0x147] sm:$0xff]
        %v831 = vld [vmem:[#allocation2 + $0x14f] sm:$0xff]
        %v832 = vld [vmem:[#allocation2 + $0x167] sm:$0xff]
        %v833 = vld [vmem:[#allocation2 + $0x16f] sm:$0xff]
        %v834 = vld [vmem:[#allocation2 + $0x187] sm:$0xff]
        %v835 = vld [vmem:[#allocation2 + $0x18f] sm:$0xff]
        %v836 = vld [vmem:[#allocation2 + $0x1a7] sm:$0xff]
        %v837 = vld [vmem:[#allocation2 + $0x1af] sm:$0xff]
        %v838 = vld [vmem:[#allocation2 + $0x1c7] sm:$0xff]
        %v839 = vld [vmem:[#allocation2 + $0x1cf] sm:$0xff]
        %v840 = vld [vmem:[#allocation2 + $0x1e7] sm:$0xff]
        %v841 = vld [vmem:[#allocation2 + $0x1ef] sm:$0xff]
        %v842 = vlaneseq
        %v843 = vshrl.u32 %v842, 7
        %v844 = vsub.s32 0, %v843
        %v845 = vrot.slane %v701, %v844
        %v846 = vmul.f32 %v810, %v845
        %v847 = vmul.f32 %v811, %v845
        %v848 = vmul.f32 %v812, %v845
        %v849 = vmul.f32 %v813, %v845
        %v850 = vmul.f32 %v814, %v845
        %v851 = vmul.f32 %v815, %v845
        %v852 = vmul.f32 %v816, %v845
        %v853 = vmul.f32 %v817, %v845
        %v854 = vmul.f32 %v818, %v845
        %v855 = vmul.f32 %v819, %v845
        %v856 = vmul.f32 %v820, %v845
        %v857 = vmul.f32 %v821, %v845
        %v858 = vmul.f32 %v822, %v845
        %v859 = vmul.f32 %v823, %v845
        %v860 = vmul.f32 %v824, %v845
        %v861 = vmul.f32 %v825, %v845
        %v862 = vmul.f32 %v826, %v845
        %v863 = vmul.f32 %v827, %v845
        %v864 = vmul.f32 %v828, %v845
        %v865 = vmul.f32 %v829, %v845
        %v866 = vmul.f32 %v830, %v845
        %v867 = vmul.f32 %v831, %v845
        %v868 = vmul.f32 %v832, %v845
        %v869 = vmul.f32 %v833, %v845
        %v870 = vmul.f32 %v834, %v845
        %v871 = vmul.f32 %v835, %v845
        %v872 = vmul.f32 %v836, %v845
        %v873 = vmul.f32 %v837, %v845
        %v874 = vmul.f32 %v838, %v845
        %v875 = vmul.f32 %v839, %v845
        %v876 = vmul.f32 %v840, %v845
        %v877 = vmul.f32 %v841, %v845
        %v878 = vadd.f32 %v846, 0.0
        %v879 = vadd.f32 %v847, 0.0
        %v880 = vadd.f32 %v848, 0.0
        %v881 = vadd.f32 %v849, 0.0
        %v882 = vadd.f32 %v850, 0.0
        %v883 = vadd.f32 %v851, 0.0
        %v884 = vadd.f32 %v852, 0.0
        %v885 = vadd.f32 %v853, 0.0
        %v886 = vadd.f32 %v854, 0.0
        %v887 = vadd.f32 %v855, 0.0
        %v888 = vadd.f32 %v856, 0.0
        %v889 = vadd.f32 %v857, 0.0
        %v890 = vadd.f32 %v858, 0.0
        %v891 = vadd.f32 %v859, 0.0
        %v892 = vadd.f32 %v860, 0.0
        %v893 = vadd.f32 %v861, 0.0
        %v894 = vadd.f32 %v862, 0.0
        %v895 = vadd.f32 %v863, 0.0
        %v896 = vadd.f32 %v864, 0.0
        %v897 = vadd.f32 %v865, 0.0
        %v898 = vadd.f32 %v866, 0.0
        %v899 = vadd.f32 %v867, 0.0
        %v900 = vadd.f32 %v868, 0.0
        %v901 = vadd.f32 %v869, 0.0
        %v902 = vadd.f32 %v870, 0.0
        %v903 = vadd.f32 %v871, 0.0
        %v904 = vadd.f32 %v872, 0.0
        %v905 = vadd.f32 %v873, 0.0
        %v906 = vadd.f32 %v874, 0.0
        %v907 = vadd.f32 %v875, 0.0
        %v908 = vadd.f32 %v876, 0.0
        %v909 = vadd.f32 %v877, 0.0
        %v910 = vld [vmem:[#allocation2 + $0x8] sm:$0xff]
        %v911 = vld [vmem:[#allocation2 + $0x10] sm:$0xff]
        %v912 = vld [vmem:[#allocation2 + $0x28] sm:$0xff]
        %v913 = vld [vmem:[#allocation2 + $0x30] sm:$0xff]
        %v914 = vld [vmem:[#allocation2 + $0x48] sm:$0xff]
        %v915 = vld [vmem:[#allocation2 + $0x50] sm:$0xff]
        %v916 = vld [vmem:[#allocation2 + $0x68] sm:$0xff]
        %v917 = vld [vmem:[#allocation2 + $0x70] sm:$0xff]
        %v918 = vld [vmem:[#allocation2 + $0x88] sm:$0xff]
        %v919 = vld [vmem:[#allocation2 + $0x90] sm:$0xff]
        %v920 = vld [vmem:[#allocation2 + $0xa8] sm:$0xff]
        %v921 = vld [vmem:[#allocation2 + $0xb0] sm:$0xff]
        %v922 = vld [vmem:[#allocation2 + $0xc8] sm:$0xff]
        %v923 = vld [vmem:[#allocation2 + $0xd0] sm:$0xff]
        %v924 = vld [vmem:[#allocation2 + $0xe8] sm:$0xff]
        %v925 = vld [vmem:[#allocation2 + $0xf0] sm:$0xff]
        %v926 = vld [vmem:[#allocation2 + $0x108] sm:$0xff]
        %v927 = vld [vmem:[#allocation2 + $0x110] sm:$0xff]
        %v928 = vld [vmem:[#allocation2 + $0x128] sm:$0xff]
        %v929 = vld [vmem:[#allocation2 + $0x130] sm:$0xff]
        %v930 = vld [vmem:[#allocation2 + $0x148] sm:$0xff]
        %v931 = vld [vmem:[#allocation2 + $0x150] sm:$0xff]
        %v932 = vld [vmem:[#allocation2 + $0x168] sm:$0xff]
        %v933 = vld [vmem:[#allocation2 + $0x170] sm:$0xff]
        %v934 = vld [vmem:[#allocation2 + $0x188] sm:$0xff]
        %v935 = vld [vmem:[#allocation2 + $0x190] sm:$0xff]
        %v936 = vld [vmem:[#allocation2 + $0x1a8] sm:$0xff]
        %v937 = vld [vmem:[#allocation2 + $0x1b0] sm:$0xff]
        %v938 = vld [vmem:[#allocation2 + $0x1c8] sm:$0xff]
        %v939 = vld [vmem:[#allocation2 + $0x1d0] sm:$0xff]
        %v940 = vld [vmem:[#allocation2 + $0x1e8] sm:$0xff]
        %v941 = vld [vmem:[#allocation2 + $0x1f0] sm:$0xff]
        %v942 = vlaneseq
        %v943 = vshrl.u32 %v942, 7
        %v944 = vsub.s32 1, %v943
        %v945 = vrot.slane %v701, %v944
        %v946 = vmul.f32 %v910, %v945
        %v947 = vmul.f32 %v911, %v945
        %v948 = vmul.f32 %v912, %v945
        %v949 = vmul.f32 %v913, %v945
        %v950 = vmul.f32 %v914, %v945
        %v951 = vmul.f32 %v915, %v945
        %v952 = vmul.f32 %v916, %v945
        %v953 = vmul.f32 %v917, %v945
        %v954 = vmul.f32 %v918, %v945
        %v955 = vmul.f32 %v919, %v945
        %v956 = vmul.f32 %v920, %v945
        %v957 = vmul.f32 %v921, %v945
        %v958 = vmul.f32 %v922, %v945
        %v959 = vmul.f32 %v923, %v945
        %v960 = vmul.f32 %v924, %v945
        %v961 = vmul.f32 %v925, %v945
        %v962 = vmul.f32 %v926, %v945
        %v963 = vmul.f32 %v927, %v945
        %v964 = vmul.f32 %v928, %v945
        %v965 = vmul.f32 %v929, %v945
        %v966 = vmul.f32 %v930, %v945
        %v967 = vmul.f32 %v931, %v945
        %v968 = vmul.f32 %v932, %v945
        %v969 = vmul.f32 %v933, %v945
        %v970 = vmul.f32 %v934, %v945
        %v971 = vmul.f32 %v935, %v945
        %v972 = vmul.f32 %v936, %v945
        %v973 = vmul.f32 %v937, %v945
        %v974 = vmul.f32 %v938, %v945
        %v975 = vmul.f32 %v939, %v945
        %v976 = vmul.f32 %v940, %v945
        %v977 = vmul.f32 %v941, %v945
        %v978 = vadd.f32 %v878, %v946
        %v979 = vadd.f32 %v879, %v947
        %v980 = vadd.f32 %v880, %v948
        %v981 = vadd.f32 %v881, %v949
        %v982 = vadd.f32 %v882, %v950
        %v983 = vadd.f32 %v883, %v951
        %v984 = vadd.f32 %v884, %v952
        %v985 = vadd.f32 %v885, %v953
        %v986 = vadd.f32 %v886, %v954
        %v987 = vadd.f32 %v887, %v955
        %v988 = vadd.f32 %v888, %v956
        %v989 = vadd.f32 %v889, %v957
        %v990 = vadd.f32 %v890, %v958
        %v991 = vadd.f32 %v891, %v959
        %v992 = vadd.f32 %v892, %v960
        %v993 = vadd.f32 %v893, %v961
        %v994 = vadd.f32 %v894, %v962
        %v995 = vadd.f32 %v895, %v963
        %v996 = vadd.f32 %v896, %v964
        %v997 = vadd.f32 %v897, %v965
        %v998 = vadd.f32 %v898, %v966
        %v999 = vadd.f32 %v899, %v967
        %v1000 = vadd.f32 %v900, %v968
        %v1001 = vadd.f32 %v901, %v969
        %v1002 = vadd.f32 %v902, %v970
        %v1003 = vadd.f32 %v903, %v971
        %v1004 = vadd.f32 %v904, %v972
        %v1005 = vadd.f32 %v905, %v973
        %v1006 = vadd.f32 %v906, %v974
        %v1007 = vadd.f32 %v907, %v975
        %v1008 = vadd.f32 %v908, %v976
        %v1009 = vadd.f32 %v909, %v977
        %v1010 = vld [vmem:[#allocation2 + $0x9] sm:$0xff]
        %v1011 = vld [vmem:[#allocation2 + $0x11] sm:$0xff]
        %v1012 = vld [vmem:[#allocation2 + $0x29] sm:$0xff]
        %v1013 = vld [vmem:[#allocation2 + $0x31] sm:$0xff]
        %v1014 = vld [vmem:[#allocation2 + $0x49] sm:$0xff]
        %v1015 = vld [vmem:[#allocation2 + $0x51] sm:$0xff]
        %v1016 = vld [vmem:[#allocation2 + $0x69] sm:$0xff]
        %v1017 = vld [vmem:[#allocation2 + $0x71] sm:$0xff]
        %v1018 = vld [vmem:[#allocation2 + $0x89] sm:$0xff]
        %v1019 = vld [vmem:[#allocation2 + $0x91] sm:$0xff]
        %v1020 = vld [vmem:[#allocation2 + $0xa9] sm:$0xff]
        %v1021 = vld [vmem:[#allocation2 + $0xb1] sm:$0xff]
        %v1022 = vld [vmem:[#allocation2 + $0xc9] sm:$0xff]
        %v1023 = vld [vmem:[#allocation2 + $0xd1] sm:$0xff]
        %v1024 = vld [vmem:[#allocation2 + $0xe9] sm:$0xff]
        %v1025 = vld [vmem:[#allocation2 + $0xf1] sm:$0xff]
        %v1026 = vld [vmem:[#allocation2 + $0x109] sm:$0xff]
        %v1027 = vld [vmem:[#allocation2 + $0x111] sm:$0xff]
        %v1028 = vld [vmem:[#allocation2 + $0x129] sm:$0xff]
        %v1029 = vld [vmem:[#allocation2 + $0x131] sm:$0xff]
        %v1030 = vld [vmem:[#allocation2 + $0x149] sm:$0xff]
        %v1031 = vld [vmem:[#allocation2 + $0x151] sm:$0xff]
        %v1032 = vld [vmem:[#allocation2 + $0x169] sm:$0xff]
        %v1033 = vld [vmem:[#allocation2 + $0x171] sm:$0xff]
        %v1034 = vld [vmem:[#allocation2 + $0x189] sm:$0xff]
        %v1035 = vld [vmem:[#allocation2 + $0x191] sm:$0xff]
        %v1036 = vld [vmem:[#allocation2 + $0x1a9] sm:$0xff]
        %v1037 = vld [vmem:[#allocation2 + $0x1b1] sm:$0xff]
        %v1038 = vld [vmem:[#allocation2 + $0x1c9] sm:$0xff]
        %v1039 = vld [vmem:[#allocation2 + $0x1d1] sm:$0xff]
        %v1040 = vld [vmem:[#allocation2 + $0x1e9] sm:$0xff]
        %v1041 = vld [vmem:[#allocation2 + $0x1f1] sm:$0xff]
        %v1042 = vlaneseq
        %v1043 = vshrl.u32 %v1042, 7
        %v1044 = vsub.s32 2, %v1043
        %v1045 = vrot.slane %v701, %v1044
        %v1046 = vmul.f32 %v1010, %v1045
        %v1047 = vmul.f32 %v1011, %v1045
        %v1048 = vmul.f32 %v1012, %v1045
        %v1049 = vmul.f32 %v1013, %v1045
        %v1050 = vmul.f32 %v1014, %v1045
        %v1051 = vmul.f32 %v1015, %v1045
        %v1052 = vmul.f32 %v1016, %v1045
        %v1053 = vmul.f32 %v1017, %v1045
        %v1054 = vmul.f32 %v1018, %v1045
        %v1055 = vmul.f32 %v1019, %v1045
        %v1056 = vmul.f32 %v1020, %v1045
        %v1057 = vmul.f32 %v1021, %v1045
        %v1058 = vmul.f32 %v1022, %v1045
        %v1059 = vmul.f32 %v1023, %v1045
        %v1060 = vmul.f32 %v1024, %v1045
        %v1061 = vmul.f32 %v1025, %v1045
        %v1062 = vmul.f32 %v1026, %v1045
        %v1063 = vmul.f32 %v1027, %v1045
        %v1064 = vmul.f32 %v1028, %v1045
        %v1065 = vmul.f32 %v1029, %v1045
        %v1066 = vmul.f32 %v1030, %v1045
        %v1067 = vmul.f32 %v1031, %v1045
        %v1068 = vmul.f32 %v1032, %v1045
        %v1069 = vmul.f32 %v1033, %v1045
        %v1070 = vmul.f32 %v1034, %v1045
        %v1071 = vmul.f32 %v1035, %v1045
        %v1072 = vmul.f32 %v1036, %v1045
        %v1073 = vmul.f32 %v1037, %v1045
        %v1074 = vmul.f32 %v1038, %v1045
        %v1075 = vmul.f32 %v1039, %v1045
        %v1076 = vmul.f32 %v1040, %v1045
        %v1077 = vmul.f32 %v1041, %v1045
        %v1078 = vadd.f32 %v978, %v1046
        %v1079 = vadd.f32 %v979, %v1047
        %v1080 = vadd.f32 %v980, %v1048
        %v1081 = vadd.f32 %v981, %v1049
        %v1082 = vadd.f32 %v982, %v1050
        %v1083 = vadd.f32 %v983, %v1051
        %v1084 = vadd.f32 %v984, %v1052
        %v1085 = vadd.f32 %v985, %v1053
        %v1086 = vadd.f32 %v986, %v1054
        %v1087 = vadd.f32 %v987, %v1055
        %v1088 = vadd.f32 %v988, %v1056
        %v1089 = vadd.f32 %v989, %v1057
        %v1090 = vadd.f32 %v990, %v1058
        %v1091 = vadd.f32 %v991, %v1059
        %v1092 = vadd.f32 %v992, %v1060
        %v1093 = vadd.f32 %v993, %v1061
        %v1094 = vadd.f32 %v994, %v1062
        %v1095 = vadd.f32 %v995, %v1063
        %v1096 = vadd.f32 %v996, %v1064
        %v1097 = vadd.f32 %v997, %v1065
        %v1098 = vadd.f32 %v998, %v1066
        %v1099 = vadd.f32 %v999, %v1067
        %v1100 = vadd.f32 %v1000, %v1068
        %v1101 = vadd.f32 %v1001, %v1069
        %v1102 = vadd.f32 %v1002, %v1070
        %v1103 = vadd.f32 %v1003, %v1071
        %v1104 = vadd.f32 %v1004, %v1072
        %v1105 = vadd.f32 %v1005, %v1073
        %v1106 = vadd.f32 %v1006, %v1074
        %v1107 = vadd.f32 %v1007, %v1075
        %v1108 = vadd.f32 %v1008, %v1076
        %v1109 = vadd.f32 %v1009, %v1077
        %v1110 = vld [vmem:[%s777 + $0x7] sm:$0xff]
        %v1111 = vld [vmem:[%s777 + $0xf] sm:$0xff]
        %v1112 = vld [vmem:[%s777 + $0x27] sm:$0xff]
        %v1113 = vld [vmem:[%s777 + $0x2f] sm:$0xff]
        %v1114 = vld [vmem:[%s777 + $0x47] sm:$0xff]
        %v1115 = vld [vmem:[%s777 + $0x4f] sm:$0xff]
        %v1116 = vld [vmem:[%s777 + $0x67] sm:$0xff]
        %v1117 = vld [vmem:[%s777 + $0x6f] sm:$0xff]
        %v1118 = vld [vmem:[%s777 + $0x87] sm:$0xff]
        %v1119 = vld [vmem:[%s777 + $0x8f] sm:$0xff]
        %v1120 = vld [vmem:[%s777 + $0xa7] sm:$0xff]
        %v1121 = vld [vmem:[%s777 + $0xaf] sm:$0xff]
        %v1122 = vld [vmem:[%s777 + $0xc7] sm:$0xff]
        %v1123 = vld [vmem:[%s777 + $0xcf] sm:$0xff]
        %v1124 = vld [vmem:[%s777 + $0xe7] sm:$0xff]
        %v1125 = vld [vmem:[%s777 + $0xef] sm:$0xff]
        %v1126 = vld [vmem:[%s777 + $0x107] sm:$0xff]
        %v1127 = vld [vmem:[%s777 + $0x10f] sm:$0xff]
        %v1128 = vld [vmem:[%s777 + $0x127] sm:$0xff]
        %v1129 = vld [vmem:[%s777 + $0x12f] sm:$0xff]
        %v1130 = vld [vmem:[%s777 + $0x147] sm:$0xff]
        %v1131 = vld [vmem:[%s777 + $0x14f] sm:$0xff]
        %v1132 = vld [vmem:[%s777 + $0x167] sm:$0xff]
        %v1133 = vld [vmem:[%s777 + $0x16f] sm:$0xff]
        %v1134 = vld [vmem:[%s777 + $0x187] sm:$0xff]
        %v1135 = vld [vmem:[%s777 + $0x18f] sm:$0xff]
        %v1136 = vld [vmem:[%s777 + $0x1a7] sm:$0xff]
        %v1137 = vld [vmem:[%s777 + $0x1af] sm:$0xff]
        %v1138 = vld [vmem:[%s777 + $0x1c7] sm:$0xff]
        %v1139 = vld [vmem:[%s777 + $0x1cf] sm:$0xff]
        %v1140 = vld [vmem:[%s777 + $0x1e7] sm:$0xff]
        %v1141 = vld [vmem:[%s777 + $0x1ef] sm:$0xff]
        %v1142 = vlaneseq
        %v1143 = vshrl.u32 %v1142, 7
        %v1144 = vsub.s32 3, %v1143
        %v1145 = vrot.slane %v701, %v1144
        %v1146 = vmul.f32 %v1110, %v1145
        %v1147 = vmul.f32 %v1111, %v1145
        %v1148 = vmul.f32 %v1112, %v1145
        %v1149 = vmul.f32 %v1113, %v1145
        %v1150 = vmul.f32 %v1114, %v1145
        %v1151 = vmul.f32 %v1115, %v1145
        %v1152 = vmul.f32 %v1116, %v1145
        %v1153 = vmul.f32 %v1117, %v1145
        %v1154 = vmul.f32 %v1118, %v1145
        %v1155 = vmul.f32 %v1119, %v1145
        %v1156 = vmul.f32 %v1120, %v1145
        %v1157 = vmul.f32 %v1121, %v1145
        %v1158 = vmul.f32 %v1122, %v1145
        %v1159 = vmul.f32 %v1123, %v1145
        %v1160 = vmul.f32 %v1124, %v1145
        %v1161 = vmul.f32 %v1125, %v1145
        %v1162 = vmul.f32 %v1126, %v1145
        %v1163 = vmul.f32 %v1127, %v1145
        %v1164 = vmul.f32 %v1128, %v1145
        %v1165 = vmul.f32 %v1129, %v1145
        %v1166 = vmul.f32 %v1130, %v1145
        %v1167 = vmul.f32 %v1131, %v1145
        %v1168 = vmul.f32 %v1132, %v1145
        %v1169 = vmul.f32 %v1133, %v1145
        %v1170 = vmul.f32 %v1134, %v1145
        %v1171 = vmul.f32 %v1135, %v1145
        %v1172 = vmul.f32 %v1136, %v1145
        %v1173 = vmul.f32 %v1137, %v1145
        %v1174 = vmul.f32 %v1138, %v1145
        %v1175 = vmul.f32 %v1139, %v1145
        %v1176 = vmul.f32 %v1140, %v1145
        %v1177 = vmul.f32 %v1141, %v1145
        %v1178 = vadd.f32 %v1078, %v1146
        %v1179 = vadd.f32 %v1079, %v1147
        %v1180 = vadd.f32 %v1080, %v1148
        %v1181 = vadd.f32 %v1081, %v1149
        %v1182 = vadd.f32 %v1082, %v1150
        %v1183 = vadd.f32 %v1083, %v1151
        %v1184 = vadd.f32 %v1084, %v1152
        %v1185 = vadd.f32 %v1085, %v1153
        %v1186 = vadd.f32 %v1086, %v1154
        %v1187 = vadd.f32 %v1087, %v1155
        %v1188 = vadd.f32 %v1088, %v1156
        %v1189 = vadd.f32 %v1089, %v1157
        %v1190 = vadd.f32 %v1090, %v1158
        %v1191 = vadd.f32 %v1091, %v1159
        %v1192 = vadd.f32 %v1092, %v1160
        %v1193 = vadd.f32 %v1093, %v1161
        %v1194 = vadd.f32 %v1094, %v1162
        %v1195 = vadd.f32 %v1095, %v1163
        %v1196 = vadd.f32 %v1096, %v1164
        %v1197 = vadd.f32 %v1097, %v1165
        %v1198 = vadd.f32 %v1098, %v1166
        %v1199 = vadd.f32 %v1099, %v1167
        %v1200 = vadd.f32 %v1100, %v1168
        %v1201 = vadd.f32 %v1101, %v1169
        %v1202 = vadd.f32 %v1102, %v1170
        %v1203 = vadd.f32 %v1103, %v1171
        %v1204 = vadd.f32 %v1104, %v1172
        %v1205 = vadd.f32 %v1105, %v1173
        %v1206 = vadd.f32 %v1106, %v1174
        %v1207 = vadd.f32 %v1107, %v1175
        %v1208 = vadd.f32 %v1108, %v1176
        %v1209 = vadd.f32 %v1109, %v1177
        %v1210 = vld [vmem:[%s777 + $0x8] sm:$0xff]
        %v1211 = vld [vmem:[%s777 + $0x10] sm:$0xff]
        %v1212 = vld [vmem:[%s777 + $0x28] sm:$0xff]
        %v1213 = vld [vmem:[%s777 + $0x30] sm:$0xff]
        %v1214 = vld [vmem:[%s777 + $0x48] sm:$0xff]
        %v1215 = vld [vmem:[%s777 + $0x50] sm:$0xff]
        %v1216 = vld [vmem:[%s777 + $0x68] sm:$0xff]
        %v1217 = vld [vmem:[%s777 + $0x70] sm:$0xff]
        %v1218 = vld [vmem:[%s777 + $0x88] sm:$0xff]
        %v1219 = vld [vmem:[%s777 + $0x90] sm:$0xff]
        %v1220 = vld [vmem:[%s777 + $0xa8] sm:$0xff]
        %v1221 = vld [vmem:[%s777 + $0xb0] sm:$0xff]
        %v1222 = vld [vmem:[%s777 + $0xc8] sm:$0xff]
        %v1223 = vld [vmem:[%s777 + $0xd0] sm:$0xff]
        %v1224 = vld [vmem:[%s777 + $0xe8] sm:$0xff]
        %v1225 = vld [vmem:[%s777 + $0xf0] sm:$0xff]
        %v1226 = vld [vmem:[%s777 + $0x108] sm:$0xff]
        %v1227 = vld [vmem:[%s777 + $0x110] sm:$0xff]
        %v1228 = vld [vmem:[%s777 + $0x128] sm:$0xff]
        %v1229 = vld [vmem:[%s777 + $0x130] sm:$0xff]
        %v1230 = vld [vmem:[%s777 + $0x148] sm:$0xff]
        %v1231 = vld [vmem:[%s777 + $0x150] sm:$0xff]
        %v1232 = vld [vmem:[%s777 + $0x168] sm:$0xff]
        %v1233 = vld [vmem:[%s777 + $0x170] sm:$0xff]
        %v1234 = vld [vmem:[%s777 + $0x188] sm:$0xff]
        %v1235 = vld [vmem:[%s777 + $0x190] sm:$0xff]
        %v1236 = vld [vmem:[%s777 + $0x1a8] sm:$0xff]
        %v1237 = vld [vmem:[%s777 + $0x1b0] sm:$0xff]
        %v1238 = vld [vmem:[%s777 + $0x1c8] sm:$0xff]
        %v1239 = vld [vmem:[%s777 + $0x1d0] sm:$0xff]
        %v1240 = vld [vmem:[%s777 + $0x1e8] sm:$0xff]
        %v1241 = vld [vmem:[%s777 + $0x1f0] sm:$0xff]
        %v1242 = vlaneseq
        %v1243 = vshrl.u32 %v1242, 7
        %v1244 = vsub.s32 4, %v1243
        %v1245 = vrot.slane %v701, %v1244
        %v1246 = vmul.f32 %v1210, %v1245
        %v1247 = vmul.f32 %v1211, %v1245
        %v1248 = vmul.f32 %v1212, %v1245
        %v1249 = vmul.f32 %v1213, %v1245
        %v1250 = vmul.f32 %v1214, %v1245
        %v1251 = vmul.f32 %v1215, %v1245
        %v1252 = vmul.f32 %v1216, %v1245
        %v1253 = vmul.f32 %v1217, %v1245
        %v1254 = vmul.f32 %v1218, %v1245
        %v1255 = vmul.f32 %v1219, %v1245
        %v1256 = vmul.f32 %v1220, %v1245
        %v1257 = vmul.f32 %v1221, %v1245
        %v1258 = vmul.f32 %v1222, %v1245
        %v1259 = vmul.f32 %v1223, %v1245
        %v1260 = vmul.f32 %v1224, %v1245
        %v1261 = vmul.f32 %v1225, %v1245
        %v1262 = vmul.f32 %v1226, %v1245
        %v1263 = vmul.f32 %v1227, %v1245
        %v1264 = vmul.f32 %v1228, %v1245
        %v1265 = vmul.f32 %v1229, %v1245
        %v1266 = vmul.f32 %v1230, %v1245
        %v1267 = vmul.f32 %v1231, %v1245
        %v1268 = vmul.f32 %v1232, %v1245
        %v1269 = vmul.f32 %v1233, %v1245
        %v1270 = vmul.f32 %v1234, %v1245
        %v1271 = vmul.f32 %v1235, %v1245
        %v1272 = vmul.f32 %v1236, %v1245
        %v1273 = vmul.f32 %v1237, %v1245
        %v1274 = vmul.f32 %v1238, %v1245
        %v1275 = vmul.f32 %v1239, %v1245
        %v1276 = vmul.f32 %v1240, %v1245
        %v1277 = vmul.f32 %v1241, %v1245
        %v1278 = vadd.f32 %v1178, %v1246
        %v1279 = vadd.f32 %v1179, %v1247
        %v1280 = vadd.f32 %v1180, %v1248
        %v1281 = vadd.f32 %v1181, %v1249
        %v1282 = vadd.f32 %v1182, %v1250
        %v1283 = vadd.f32 %v1183, %v1251
        %v1284 = vadd.f32 %v1184, %v1252
        %v1285 = vadd.f32 %v1185, %v1253
        %v1286 = vadd.f32 %v1186, %v1254
        %v1287 = vadd.f32 %v1187, %v1255
        %v1288 = vadd.f32 %v1188, %v1256
        %v1289 = vadd.f32 %v1189, %v1257
        %v1290 = vadd.f32 %v1190, %v1258
        %v1291 = vadd.f32 %v1191, %v1259
        %v1292 = vadd.f32 %v1192, %v1260
        %v1293 = vadd.f32 %v1193, %v1261
        %v1294 = vadd.f32 %v1194, %v1262
        %v1295 = vadd.f32 %v1195, %v1263
        %v1296 = vadd.f32 %v1196, %v1264
        %v1297 = vadd.f32 %v1197, %v1265
        %v1298 = vadd.f32 %v1198, %v1266
        %v1299 = vadd.f32 %v1199, %v1267
        %v1300 = vadd.f32 %v1200, %v1268
        %v1301 = vadd.f32 %v1201, %v1269
        %v1302 = vadd.f32 %v1202, %v1270
        %v1303 = vadd.f32 %v1203, %v1271
        %v1304 = vadd.f32 %v1204, %v1272
        %v1305 = vadd.f32 %v1205, %v1273
        %v1306 = vadd.f32 %v1206, %v1274
        %v1307 = vadd.f32 %v1207, %v1275
        %v1308 = vadd.f32 %v1208, %v1276
        %v1309 = vadd.f32 %v1209, %v1277
        %v1310 = vld [vmem:[%s777 + $0x9] sm:$0xff]
        %v1311 = vld [vmem:[%s777 + $0x11] sm:$0xff]
        %v1312 = vld [vmem:[%s777 + $0x29] sm:$0xff]
        %v1313 = vld [vmem:[%s777 + $0x31] sm:$0xff]
        %v1314 = vld [vmem:[%s777 + $0x49] sm:$0xff]
        %v1315 = vld [vmem:[%s777 + $0x51] sm:$0xff]
        %v1316 = vld [vmem:[%s777 + $0x69] sm:$0xff]
        %v1317 = vld [vmem:[%s777 + $0x71] sm:$0xff]
        %v1318 = vld [vmem:[%s777 + $0x89] sm:$0xff]
        %v1319 = vld [vmem:[%s777 + $0x91] sm:$0xff]
        %v1320 = vld [vmem:[%s777 + $0xa9] sm:$0xff]
        %v1321 = vld [vmem:[%s777 + $0xb1] sm:$0xff]
        %v1322 = vld [vmem:[%s777 + $0xc9] sm:$0xff]
        %v1323 = vld [vmem:[%s777 + $0xd1] sm:$0xff]
        %v1324 = vld [vmem:[%s777 + $0xe9] sm:$0xff]
        %v1325 = vld [vmem:[%s777 + $0xf1] sm:$0xff]
        %v1326 = vld [vmem:[%s777 + $0x109] sm:$0xff]
        %v1327 = vld [vmem:[%s777 + $0x111] sm:$0xff]
        %v1328 = vld [vmem:[%s777 + $0x129] sm:$0xff]
        %v1329 = vld [vmem:[%s777 + $0x131] sm:$0xff]
        %v1330 = vld [vmem:[%s777 + $0x149] sm:$0xff]
        %v1331 = vld [vmem:[%s777 + $0x151] sm:$0xff]
        %v1332 = vld [vmem:[%s777 + $0x169] sm:$0xff]
        %v1333 = vld [vmem:[%s777 + $0x171] sm:$0xff]
        %v1334 = vld [vmem:[%s777 + $0x189] sm:$0xff]
        %v1335 = vld [vmem:[%s777 + $0x191] sm:$0xff]
        %v1336 = vld [vmem:[%s777 + $0x1a9] sm:$0xff]
        %v1337 = vld [vmem:[%s777 + $0x1b1] sm:$0xff]
        %v1338 = vld [vmem:[%s777 + $0x1c9] sm:$0xff]
        %v1339 = vld [vmem:[%s777 + $0x1d1] sm:$0xff]
        %v1340 = vld [vmem:[%s777 + $0x1e9] sm:$0xff]
        %v1341 = vld [vmem:[%s777 + $0x1f1] sm:$0xff]
        %v1342 = vlaneseq
        %v1343 = vshrl.u32 %v1342, 7
        %v1344 = vsub.s32 5, %v1343
        %v1345 = vrot.slane %v701, %v1344
        %v1346 = vmul.f32 %v1310, %v1345
        %v1347 = vmul.f32 %v1311, %v1345
        %v1348 = vmul.f32 %v1312, %v1345
        %v1349 = vmul.f32 %v1313, %v1345
        %v1350 = vmul.f32 %v1314, %v1345
        %v1351 = vmul.f32 %v1315, %v1345
        %v1352 = vmul.f32 %v1316, %v1345
        %v1353 = vmul.f32 %v1317, %v1345
        %v1354 = vmul.f32 %v1318, %v1345
        %v1355 = vmul.f32 %v1319, %v1345
        %v1356 = vmul.f32 %v1320, %v1345
        %v1357 = vmul.f32 %v1321, %v1345
        %v1358 = vmul.f32 %v1322, %v1345
        %v1359 = vmul.f32 %v1323, %v1345
        %v1360 = vmul.f32 %v1324, %v1345
        %v1361 = vmul.f32 %v1325, %v1345
        %v1362 = vmul.f32 %v1326, %v1345
        %v1363 = vmul.f32 %v1327, %v1345
        %v1364 = vmul.f32 %v1328, %v1345
        %v1365 = vmul.f32 %v1329, %v1345
        %v1366 = vmul.f32 %v1330, %v1345
        %v1367 = vmul.f32 %v1331, %v1345
        %v1368 = vmul.f32 %v1332, %v1345
        %v1369 = vmul.f32 %v1333, %v1345
        %v1370 = vmul.f32 %v1334, %v1345
        %v1371 = vmul.f32 %v1335, %v1345
        %v1372 = vmul.f32 %v1336, %v1345
        %v1373 = vmul.f32 %v1337, %v1345
        %v1374 = vmul.f32 %v1338, %v1345
        %v1375 = vmul.f32 %v1339, %v1345
        %v1376 = vmul.f32 %v1340, %v1345
        %v1377 = vmul.f32 %v1341, %v1345
        %v1378 = vadd.f32 %v1278, %v1346
        %v1379 = vadd.f32 %v1279, %v1347
        %v1380 = vadd.f32 %v1280, %v1348
        %v1381 = vadd.f32 %v1281, %v1349
        %v1382 = vadd.f32 %v1282, %v1350
        %v1383 = vadd.f32 %v1283, %v1351
        %v1384 = vadd.f32 %v1284, %v1352
        %v1385 = vadd.f32 %v1285, %v1353
        %v1386 = vadd.f32 %v1286, %v1354
        %v1387 = vadd.f32 %v1287, %v1355
        %v1388 = vadd.f32 %v1288, %v1356
        %v1389 = vadd.f32 %v1289, %v1357
        %v1390 = vadd.f32 %v1290, %v1358
        %v1391 = vadd.f32 %v1291, %v1359
        %v1392 = vadd.f32 %v1292, %v1360
        %v1393 = vadd.f32 %v1293, %v1361
        %v1394 = vadd.f32 %v1294, %v1362
        %v1395 = vadd.f32 %v1295, %v1363
        %v1396 = vadd.f32 %v1296, %v1364
        %v1397 = vadd.f32 %v1297, %v1365
        %v1398 = vadd.f32 %v1298, %v1366
        %v1399 = vadd.f32 %v1299, %v1367
        %v1400 = vadd.f32 %v1300, %v1368
        %v1401 = vadd.f32 %v1301, %v1369
        %v1402 = vadd.f32 %v1302, %v1370
        %v1403 = vadd.f32 %v1303, %v1371
        %v1404 = vadd.f32 %v1304, %v1372
        %v1405 = vadd.f32 %v1305, %v1373
        %v1406 = vadd.f32 %v1306, %v1374
        %v1407 = vadd.f32 %v1307, %v1375
        %v1408 = vadd.f32 %v1308, %v1376
        %v1409 = vadd.f32 %v1309, %v1377
        %s1410 = scalar_lea.vmem [#allocation2], 64
        %v1411 = vld [vmem:[%s1410 + $0x7] sm:$0xff]
        %v1412 = vld [vmem:[%s1410 + $0xf] sm:$0xff]
        %v1413 = vld [vmem:[%s1410 + $0x27] sm:$0xff]
        %v1414 = vld [vmem:[%s1410 + $0x2f] sm:$0xff]
        %v1415 = vld [vmem:[%s1410 + $0x47] sm:$0xff]
        %v1416 = vld [vmem:[%s1410 + $0x4f] sm:$0xff]
        %v1417 = vld [vmem:[%s1410 + $0x67] sm:$0xff]
        %v1418 = vld [vmem:[%s1410 + $0x6f] sm:$0xff]
        %v1419 = vld [vmem:[%s1410 + $0x87] sm:$0xff]
        %v1420 = vld [vmem:[%s1410 + $0x8f] sm:$0xff]
        %v1421 = vld [vmem:[%s1410 + $0xa7] sm:$0xff]
        %v1422 = vld [vmem:[%s1410 + $0xaf] sm:$0xff]
        %v1423 = vld [vmem:[%s1410 + $0xc7] sm:$0xff]
        %v1424 = vld [vmem:[%s1410 + $0xcf] sm:$0xff]
        %v1425 = vld [vmem:[%s1410 + $0xe7] sm:$0xff]
        %v1426 = vld [vmem:[%s1410 + $0xef] sm:$0xff]
        %v1427 = vld [vmem:[%s1410 + $0x107] sm:$0xff]
        %v1428 = vld [vmem:[%s1410 + $0x10f] sm:$0xff]
        %v1429 = vld [vmem:[%s1410 + $0x127] sm:$0xff]
        %v1430 = vld [vmem:[%s1410 + $0x12f] sm:$0xff]
        %v1431 = vld [vmem:[%s1410 + $0x147] sm:$0xff]
        %v1432 = vld [vmem:[%s1410 + $0x14f] sm:$0xff]
        %v1433 = vld [vmem:[%s1410 + $0x167] sm:$0xff]
        %v1434 = vld [vmem:[%s1410 + $0x16f] sm:$0xff]
        %v1435 = vld [vmem:[%s1410 + $0x187] sm:$0xff]
        %v1436 = vld [vmem:[%s1410 + $0x18f] sm:$0xff]
        %v1437 = vld [vmem:[%s1410 + $0x1a7] sm:$0xff]
        %v1438 = vld [vmem:[%s1410 + $0x1af] sm:$0xff]
        %v1439 = vld [vmem:[%s1410 + $0x1c7] sm:$0xff]
        %v1440 = vld [vmem:[%s1410 + $0x1cf] sm:$0xff]
        %v1441 = vld [vmem:[%s1410 + $0x1e7] sm:$0xff]
        %v1442 = vld [vmem:[%s1410 + $0x1ef] sm:$0xff]
        %v1443 = vlaneseq
        %v1444 = vshrl.u32 %v1443, 7
        %v1445 = vsub.s32 6, %v1444
        %v1446 = vrot.slane %v701, %v1445
        %v1447 = vmul.f32 %v1411, %v1446
        %v1448 = vmul.f32 %v1412, %v1446
        %v1449 = vmul.f32 %v1413, %v1446
        %v1450 = vmul.f32 %v1414, %v1446
        %v1451 = vmul.f32 %v1415, %v1446
        %v1452 = vmul.f32 %v1416, %v1446
        %v1453 = vmul.f32 %v1417, %v1446
        %v1454 = vmul.f32 %v1418, %v1446
        %v1455 = vmul.f32 %v1419, %v1446
        %v1456 = vmul.f32 %v1420, %v1446
        %v1457 = vmul.f32 %v1421, %v1446
        %v1458 = vmul.f32 %v1422, %v1446
        %v1459 = vmul.f32 %v1423, %v1446
        %v1460 = vmul.f32 %v1424, %v1446
        %v1461 = vmul.f32 %v1425, %v1446
        %v1462 = vmul.f32 %v1426, %v1446
        %v1463 = vmul.f32 %v1427, %v1446
        %v1464 = vmul.f32 %v1428, %v1446
        %v1465 = vmul.f32 %v1429, %v1446
        %v1466 = vmul.f32 %v1430, %v1446
        %v1467 = vmul.f32 %v1431, %v1446
        %v1468 = vmul.f32 %v1432, %v1446
        %v1469 = vmul.f32 %v1433, %v1446
        %v1470 = vmul.f32 %v1434, %v1446
        %v1471 = vmul.f32 %v1435, %v1446
        %v1472 = vmul.f32 %v1436, %v1446
        %v1473 = vmul.f32 %v1437, %v1446
        %v1474 = vmul.f32 %v1438, %v1446
        %v1475 = vmul.f32 %v1439, %v1446
        %v1476 = vmul.f32 %v1440, %v1446
        %v1477 = vmul.f32 %v1441, %v1446
        %v1478 = vmul.f32 %v1442, %v1446
        %v1479 = vadd.f32 %v1378, %v1447
        %v1480 = vadd.f32 %v1379, %v1448
        %v1481 = vadd.f32 %v1380, %v1449
        %v1482 = vadd.f32 %v1381, %v1450
        %v1483 = vadd.f32 %v1382, %v1451
        %v1484 = vadd.f32 %v1383, %v1452
        %v1485 = vadd.f32 %v1384, %v1453
        %v1486 = vadd.f32 %v1385, %v1454
        %v1487 = vadd.f32 %v1386, %v1455
        %v1488 = vadd.f32 %v1387, %v1456
        %v1489 = vadd.f32 %v1388, %v1457
        %v1490 = vadd.f32 %v1389, %v1458
        %v1491 = vadd.f32 %v1390, %v1459
        %v1492 = vadd.f32 %v1391, %v1460
        %v1493 = vadd.f32 %v1392, %v1461
        %v1494 = vadd.f32 %v1393, %v1462
        %v1495 = vadd.f32 %v1394, %v1463
        %v1496 = vadd.f32 %v1395, %v1464
        %v1497 = vadd.f32 %v1396, %v1465
        %v1498 = vadd.f32 %v1397, %v1466
        %v1499 = vadd.f32 %v1398, %v1467
        %v1500 = vadd.f32 %v1399, %v1468
        %v1501 = vadd.f32 %v1400, %v1469
        %v1502 = vadd.f32 %v1401, %v1470
        %v1503 = vadd.f32 %v1402, %v1471
        %v1504 = vadd.f32 %v1403, %v1472
        %v1505 = vadd.f32 %v1404, %v1473
        %v1506 = vadd.f32 %v1405, %v1474
        %v1507 = vadd.f32 %v1406, %v1475
        %v1508 = vadd.f32 %v1407, %v1476
        %v1509 = vadd.f32 %v1408, %v1477
        %v1510 = vadd.f32 %v1409, %v1478
        %v1511 = vld [vmem:[%s1410 + $0x8] sm:$0xff]
        %v1512 = vld [vmem:[%s1410 + $0x10] sm:$0xff]
        %v1513 = vld [vmem:[%s1410 + $0x28] sm:$0xff]
        %v1514 = vld [vmem:[%s1410 + $0x30] sm:$0xff]
        %v1515 = vld [vmem:[%s1410 + $0x48] sm:$0xff]
        %v1516 = vld [vmem:[%s1410 + $0x50] sm:$0xff]
        %v1517 = vld [vmem:[%s1410 + $0x68] sm:$0xff]
        %v1518 = vld [vmem:[%s1410 + $0x70] sm:$0xff]
        %v1519 = vld [vmem:[%s1410 + $0x88] sm:$0xff]
        %v1520 = vld [vmem:[%s1410 + $0x90] sm:$0xff]
        %v1521 = vld [vmem:[%s1410 + $0xa8] sm:$0xff]
        %v1522 = vld [vmem:[%s1410 + $0xb0] sm:$0xff]
        %v1523 = vld [vmem:[%s1410 + $0xc8] sm:$0xff]
        %v1524 = vld [vmem:[%s1410 + $0xd0] sm:$0xff]
        %v1525 = vld [vmem:[%s1410 + $0xe8] sm:$0xff]
        %v1526 = vld [vmem:[%s1410 + $0xf0] sm:$0xff]
        %v1527 = vld [vmem:[%s1410 + $0x108] sm:$0xff]
        %v1528 = vld [vmem:[%s1410 + $0x110] sm:$0xff]
        %v1529 = vld [vmem:[%s1410 + $0x128] sm:$0xff]
        %v1530 = vld [vmem:[%s1410 + $0x130] sm:$0xff]
        %v1531 = vld [vmem:[%s1410 + $0x148] sm:$0xff]
        %v1532 = vld [vmem:[%s1410 + $0x150] sm:$0xff]
        %v1533 = vld [vmem:[%s1410 + $0x168] sm:$0xff]
        %v1534 = vld [vmem:[%s1410 + $0x170] sm:$0xff]
        %v1535 = vld [vmem:[%s1410 + $0x188] sm:$0xff]
        %v1536 = vld [vmem:[%s1410 + $0x190] sm:$0xff]
        %v1537 = vld [vmem:[%s1410 + $0x1a8] sm:$0xff]
        %v1538 = vld [vmem:[%s1410 + $0x1b0] sm:$0xff]
        %v1539 = vld [vmem:[%s1410 + $0x1c8] sm:$0xff]
        %v1540 = vld [vmem:[%s1410 + $0x1d0] sm:$0xff]
        %v1541 = vld [vmem:[%s1410 + $0x1e8] sm:$0xff]
        %v1542 = vld [vmem:[%s1410 + $0x1f0] sm:$0xff]
        %v1543 = vlaneseq
        %v1544 = vshrl.u32 %v1543, 7
        %v1545 = vsub.s32 7, %v1544
        %v1546 = vrot.slane %v701, %v1545
        %v1547 = vmul.f32 %v1511, %v1546
        %v1548 = vmul.f32 %v1512, %v1546
        %v1549 = vmul.f32 %v1513, %v1546
        %v1550 = vmul.f32 %v1514, %v1546
        %v1551 = vmul.f32 %v1515, %v1546
        %v1552 = vmul.f32 %v1516, %v1546
        %v1553 = vmul.f32 %v1517, %v1546
        %v1554 = vmul.f32 %v1518, %v1546
        %v1555 = vmul.f32 %v1519, %v1546
        %v1556 = vmul.f32 %v1520, %v1546
        %v1557 = vmul.f32 %v1521, %v1546
        %v1558 = vmul.f32 %v1522, %v1546
        %v1559 = vmul.f32 %v1523, %v1546
        %v1560 = vmul.f32 %v1524, %v1546
        %v1561 = vmul.f32 %v1525, %v1546
        %v1562 = vmul.f32 %v1526, %v1546
        %v1563 = vmul.f32 %v1527, %v1546
        %v1564 = vmul.f32 %v1528, %v1546
        %v1565 = vmul.f32 %v1529, %v1546
        %v1566 = vmul.f32 %v1530, %v1546
        %v1567 = vmul.f32 %v1531, %v1546
        %v1568 = vmul.f32 %v1532, %v1546
        %v1569 = vmul.f32 %v1533, %v1546
        %v1570 = vmul.f32 %v1534, %v1546
        %v1571 = vmul.f32 %v1535, %v1546
        %v1572 = vmul.f32 %v1536, %v1546
        %v1573 = vmul.f32 %v1537, %v1546
        %v1574 = vmul.f32 %v1538, %v1546
        %v1575 = vmul.f32 %v1539, %v1546
        %v1576 = vmul.f32 %v1540, %v1546
        %v1577 = vmul.f32 %v1541, %v1546
        %v1578 = vmul.f32 %v1542, %v1546
        %v1579 = vadd.f32 %v1479, %v1547
        %v1580 = vadd.f32 %v1480, %v1548
        %v1581 = vadd.f32 %v1481, %v1549
        %v1582 = vadd.f32 %v1482, %v1550
        %v1583 = vadd.f32 %v1483, %v1551
        %v1584 = vadd.f32 %v1484, %v1552
        %v1585 = vadd.f32 %v1485, %v1553
        %v1586 = vadd.f32 %v1486, %v1554
        %v1587 = vadd.f32 %v1487, %v1555
        %v1588 = vadd.f32 %v1488, %v1556
        %v1589 = vadd.f32 %v1489, %v1557
        %v1590 = vadd.f32 %v1490, %v1558
        %v1591 = vadd.f32 %v1491, %v1559
        %v1592 = vadd.f32 %v1492, %v1560
        %v1593 = vadd.f32 %v1493, %v1561
        %v1594 = vadd.f32 %v1494, %v1562
        %v1595 = vadd.f32 %v1495, %v1563
        %v1596 = vadd.f32 %v1496, %v1564
        %v1597 = vadd.f32 %v1497, %v1565
        %v1598 = vadd.f32 %v1498, %v1566
        %v1599 = vadd.f32 %v1499, %v1567
        %v1600 = vadd.f32 %v1500, %v1568
        %v1601 = vadd.f32 %v1501, %v1569
        %v1602 = vadd.f32 %v1502, %v1570
        %v1603 = vadd.f32 %v1503, %v1571
        %v1604 = vadd.f32 %v1504, %v1572
        %v1605 = vadd.f32 %v1505, %v1573
        %v1606 = vadd.f32 %v1506, %v1574
        %v1607 = vadd.f32 %v1507, %v1575
        %v1608 = vadd.f32 %v1508, %v1576
        %v1609 = vadd.f32 %v1509, %v1577
        %v1610 = vadd.f32 %v1510, %v1578
        %v1611 = vld [vmem:[%s1410 + $0x9] sm:$0xff]
        %v1612 = vld [vmem:[%s1410 + $0x11] sm:$0xff]
        %v1613 = vld [vmem:[%s1410 + $0x29] sm:$0xff]
        %v1614 = vld [vmem:[%s1410 + $0x31] sm:$0xff]
        %v1615 = vld [vmem:[%s1410 + $0x49] sm:$0xff]
        %v1616 = vld [vmem:[%s1410 + $0x51] sm:$0xff]
        %v1617 = vld [vmem:[%s1410 + $0x69] sm:$0xff]
        %v1618 = vld [vmem:[%s1410 + $0x71] sm:$0xff]
        %v1619 = vld [vmem:[%s1410 + $0x89] sm:$0xff]
        %v1620 = vld [vmem:[%s1410 + $0x91] sm:$0xff]
        %v1621 = vld [vmem:[%s1410 + $0xa9] sm:$0xff]
        %v1622 = vld [vmem:[%s1410 + $0xb1] sm:$0xff]
        %v1623 = vld [vmem:[%s1410 + $0xc9] sm:$0xff]
        %v1624 = vld [vmem:[%s1410 + $0xd1] sm:$0xff]
        %v1625 = vld [vmem:[%s1410 + $0xe9] sm:$0xff]
        %v1626 = vld [vmem:[%s1410 + $0xf1] sm:$0xff]
        %v1627 = vld [vmem:[%s1410 + $0x109] sm:$0xff]
        %v1628 = vld [vmem:[%s1410 + $0x111] sm:$0xff]
        %v1629 = vld [vmem:[%s1410 + $0x129] sm:$0xff]
        %v1630 = vld [vmem:[%s1410 + $0x131] sm:$0xff]
        %v1631 = vld [vmem:[%s1410 + $0x149] sm:$0xff]
        %v1632 = vld [vmem:[%s1410 + $0x151] sm:$0xff]
        %v1633 = vld [vmem:[%s1410 + $0x169] sm:$0xff]
        %v1634 = vld [vmem:[%s1410 + $0x171] sm:$0xff]
        %v1635 = vld [vmem:[%s1410 + $0x189] sm:$0xff]
        %v1636 = vld [vmem:[%s1410 + $0x191] sm:$0xff]
        %v1637 = vld [vmem:[%s1410 + $0x1a9] sm:$0xff]
        %v1638 = vld [vmem:[%s1410 + $0x1b1] sm:$0xff]
        %v1639 = vld [vmem:[%s1410 + $0x1c9] sm:$0xff]
        %v1640 = vld [vmem:[%s1410 + $0x1d1] sm:$0xff]
        %v1641 = vld [vmem:[%s1410 + $0x1e9] sm:$0xff]
        %v1642 = vld [vmem:[%s1410 + $0x1f1] sm:$0xff]
        %v1643 = vlaneseq
        %v1644 = vshrl.u32 %v1643, 7
        %v1645 = vsub.s32 0, %v1644
        %v1646 = vrot.slane %v702, %v1645
        %v1647 = vmul.f32 %v1611, %v1646
        %v1648 = vmul.f32 %v1612, %v1646
        %v1649 = vmul.f32 %v1613, %v1646
        %v1650 = vmul.f32 %v1614, %v1646
        %v1651 = vmul.f32 %v1615, %v1646
        %v1652 = vmul.f32 %v1616, %v1646
        %v1653 = vmul.f32 %v1617, %v1646
        %v1654 = vmul.f32 %v1618, %v1646
        %v1655 = vmul.f32 %v1619, %v1646
        %v1656 = vmul.f32 %v1620, %v1646
        %v1657 = vmul.f32 %v1621, %v1646
        %v1658 = vmul.f32 %v1622, %v1646
        %v1659 = vmul.f32 %v1623, %v1646
        %v1660 = vmul.f32 %v1624, %v1646
        %v1661 = vmul.f32 %v1625, %v1646
        %v1662 = vmul.f32 %v1626, %v1646
        %v1663 = vmul.f32 %v1627, %v1646
        %v1664 = vmul.f32 %v1628, %v1646
        %v1665 = vmul.f32 %v1629, %v1646
        %v1666 = vmul.f32 %v1630, %v1646
        %v1667 = vmul.f32 %v1631, %v1646
        %v1668 = vmul.f32 %v1632, %v1646
        %v1669 = vmul.f32 %v1633, %v1646
        %v1670 = vmul.f32 %v1634, %v1646
        %v1671 = vmul.f32 %v1635, %v1646
        %v1672 = vmul.f32 %v1636, %v1646
        %v1673 = vmul.f32 %v1637, %v1646
        %v1674 = vmul.f32 %v1638, %v1646
        %v1675 = vmul.f32 %v1639, %v1646
        %v1676 = vmul.f32 %v1640, %v1646
        %v1677 = vmul.f32 %v1641, %v1646
        %v1678 = vmul.f32 %v1642, %v1646
        %v1679 = vadd.f32 %v1579, %v1647
        %v1680 = vadd.f32 %v1580, %v1648
        %v1681 = vadd.f32 %v1581, %v1649
        %v1682 = vadd.f32 %v1582, %v1650
        %v1683 = vadd.f32 %v1583, %v1651
        %v1684 = vadd.f32 %v1584, %v1652
        %v1685 = vadd.f32 %v1585, %v1653
        %v1686 = vadd.f32 %v1586, %v1654
        %v1687 = vadd.f32 %v1587, %v1655
        %v1688 = vadd.f32 %v1588, %v1656
        %v1689 = vadd.f32 %v1589, %v1657
        %v1690 = vadd.f32 %v1590, %v1658
        %v1691 = vadd.f32 %v1591, %v1659
        %v1692 = vadd.f32 %v1592, %v1660
        %v1693 = vadd.f32 %v1593, %v1661
        %v1694 = vadd.f32 %v1594, %v1662
        %v1695 = vadd.f32 %v1595, %v1663
        %v1696 = vadd.f32 %v1596, %v1664
        %v1697 = vadd.f32 %v1597, %v1665
        %v1698 = vadd.f32 %v1598, %v1666
        %v1699 = vadd.f32 %v1599, %v1667
        %v1700 = vadd.f32 %v1600, %v1668
        %v1701 = vadd.f32 %v1601, %v1669
        %v1702 = vadd.f32 %v1602, %v1670
        %v1703 = vadd.f32 %v1603, %v1671
        %v1704 = vadd.f32 %v1604, %v1672
        %v1705 = vadd.f32 %v1605, %v1673
        %v1706 = vadd.f32 %v1606, %v1674
        %v1707 = vadd.f32 %v1607, %v1675
        %v1708 = vadd.f32 %v1608, %v1676
        %v1709 = vadd.f32 %v1609, %v1677
        %v1710 = vadd.f32 %v1610, %v1678
        %v1712 = vlaneseq
        %v1713 = vshrl.u32 %v1712, 7
        %v1714 = vsub.s32 0, %v1713
        %v1715 = vrot.slane %v703, %v1714
        %v1717 = vadd.f32 %v1679, %v1715
        %v1718 = vadd.f32 %v1680, %v1715
        %v1719 = vadd.f32 %v1681, %v1715
        %v1720 = vadd.f32 %v1682, %v1715
        %v1721 = vadd.f32 %v1683, %v1715
        %v1722 = vadd.f32 %v1684, %v1715
        %v1723 = vadd.f32 %v1685, %v1715
        %v1724 = vadd.f32 %v1686, %v1715
        %v1725 = vadd.f32 %v1687, %v1715
        %v1726 = vadd.f32 %v1688, %v1715
        %v1727 = vadd.f32 %v1689, %v1715
        %v1728 = vadd.f32 %v1690, %v1715
        %v1729 = vadd.f32 %v1691, %v1715
        %v1730 = vadd.f32 %v1692, %v1715
        %v1731 = vadd.f32 %v1693, %v1715
        %v1732 = vadd.f32 %v1694, %v1715
        %v1733 = vadd.f32 %v1695, %v1715
        %v1734 = vadd.f32 %v1696, %v1715
        %v1735 = vadd.f32 %v1697, %v1715
        %v1736 = vadd.f32 %v1698, %v1715
        %v1737 = vadd.f32 %v1699, %v1715
        %v1738 = vadd.f32 %v1700, %v1715
        %v1739 = vadd.f32 %v1701, %v1715
        %v1740 = vadd.f32 %v1702, %v1715
        %v1741 = vadd.f32 %v1703, %v1715
        %v1742 = vadd.f32 %v1704, %v1715
        %v1743 = vadd.f32 %v1705, %v1715
        %v1744 = vadd.f32 %v1706, %v1715
        %v1745 = vadd.f32 %v1707, %v1715
        %v1746 = vadd.f32 %v1708, %v1715
        %v1747 = vadd.f32 %v1709, %v1715
        %v1748 = vadd.f32 %v1710, %v1715
        %v1749 = vld [vmem:[%s5] sm:$0xff]
        %v1750 = vld [vmem:[%s5 + $0x8] sm:$0xff]
        %v1751 = vld [vmem:[%s6] sm:$0x1]
        %v1753 = vlaneseq
        %v1754 = vshrl.u32 %v1753, 7
        %v1755 = vsub.s32 0, %v1754
        %v1756 = vrot.slane %v1751, %v1755
        %v1759 = vsel %vm704, %v1717, 0
        %v1762 = vsel %vm704, %v1718, 0
        %v1765 = vsel %vm704, %v1719, 0
        %v1768 = vsel %vm704, %v1720, 0
        %v1771 = vsel %vm704, %v1721, 0
        %v1774 = vsel %vm704, %v1722, 0
        %v1777 = vsel %vm704, %v1723, 0
        %v1780 = vsel %vm704, %v1724, 0
        %v1783 = vsel %vm704, %v1725, 0
        %v1786 = vsel %vm704, %v1726, 0
        %v1789 = vsel %vm704, %v1727, 0
        %v1792 = vsel %vm704, %v1728, 0
        %v1795 = vsel %vm704, %v1729, 0
        %v1798 = vsel %vm704, %v1730, 0
        %v1801 = vsel %vm704, %v1731, 0
        %v1804 = vsel %vm704, %v1732, 0
        %v1807 = vsel %vm704, %v1733, 0
        %v1810 = vsel %vm704, %v1734, 0
        %v1813 = vsel %vm704, %v1735, 0
        %v1816 = vsel %vm704, %v1736, 0
        %v1819 = vsel %vm704, %v1737, 0
        %v1822 = vsel %vm704, %v1738, 0
        %v1825 = vsel %vm704, %v1739, 0
        %v1828 = vsel %vm704, %v1740, 0
        %v1831 = vsel %vm704, %v1741, 0
        %v1834 = vsel %vm704, %v1742, 0
        %v1837 = vsel %vm704, %v1743, 0
        %v1840 = vsel %vm704, %v1744, 0
        %v1843 = vsel %vm704, %v1745, 0
        %v1846 = vsel %vm704, %v1746, 0
        %v1849 = vsel %vm704, %v1747, 0
        %v1852 = vsel %vm704, %v1748, 0
        %1854 = vmatprep.subr.mxu0 0.0
        %1855 = vmatpush1.msra.mxu0 %v1749
        %1856 = vmatprep.subr.mxu0 0.0
        %1857 = vmatpush1.msra.mxu0 %v1750
        %1858 = vmatprep.subr.mxu0 0.0
        %1859 = vmatpush1.msra.mxu0 0.0
        %1860 = vmatprep.subr.mxu0 0.0
        %1861 = vmatpush1.msra.mxu0 0.0
        %1862 = vmatprep.subr.mxu0 0.0
        %1863 = vmatpush1.msra.mxu0 0.0
        %1864 = vmatprep.subr.mxu0 0.0
        %1865 = vmatpush1.msra.mxu0 0.0
        %1866 = vmatprep.subr.mxu0 0.0
        %1867 = vmatpush1.msra.mxu0 0.0
        %1868 = vmatprep.subr.mxu0 0.0
        %1869 = vmatpush1.msra.mxu0 0.0
        %1870 = vmatprep.subr.mxu0 0.0
        %1871 = vmatpush1.msra.mxu0 0.0
        %1872 = vmatprep.subr.mxu0 0.0
        %1873 = vmatpush1.msra.mxu0 0.0
        %1874 = vmatprep.subr.mxu0 0.0
        %1875 = vmatpush1.msra.mxu0 0.0
        %1876 = vmatprep.subr.mxu0 0.0
        %1877 = vmatpush1.msra.mxu0 0.0
        %1878 = vmatprep.subr.mxu0 0.0
        %1879 = vmatpush1.msra.mxu0 0.0
        %1880 = vmatprep.subr.mxu0 0.0
        %1881 = vmatpush1.msra.mxu0 0.0
        %1882 = vmatprep.subr.mxu0 0.0
        %1883 = vmatpush1.msra.mxu0 0.0
        %1884 = vmatprep.subr.mxu0 0.0
        %1885 = vmatpush1.msra.mxu0 0.0
        %1886 = vmatprep.subr.mxu0 0.0
        %1887 = vmatpush1.msra.mxu0 0.0
        %1888 = vmatprep.subr.mxu0 0.0
        %1889 = vmatpush1.msra.mxu0 0.0
        %1890 = vmatprep.subr.mxu0 0.0
        %1891 = vmatpush1.msra.mxu0 0.0
        %1892 = vmatprep.subr.mxu0 0.0
        %1893 = vmatpush1.msra.mxu0 0.0
        %1894 = vmatprep.subr.mxu0 0.0
        %1895 = vmatpush1.msra.mxu0 0.0
        %1896 = vmatprep.subr.mxu0 0.0
        %1897 = vmatpush1.msra.mxu0 0.0
        %1898 = vmatprep.subr.mxu0 0.0
        %1899 = vmatpush1.msra.mxu0 0.0
        %1900 = vmatprep.subr.mxu0 0.0
        %1901 = vmatpush1.msra.mxu0 0.0
        %1902 = vmatprep.subr.mxu0 0.0
        %1903 = vmatpush1.msra.mxu0 0.0
        %1904 = vmatprep.subr.mxu0 0.0
        %1905 = vmatpush1.msra.mxu0 0.0
        %1906 = vmatprep.subr.mxu0 0.0
        %1907 = vmatpush1.msra.mxu0 0.0
        %1908 = vmatprep.subr.mxu0 0.0
        %1909 = vmatpush1.msra.mxu0 0.0
        %1910 = vmatprep.subr.mxu0 0.0
        %1911 = vmatpush1.msra.mxu0 0.0
        %1912 = vmatprep.subr.mxu0 0.0
        %1913 = vmatpush1.msra.mxu0 0.0
        %1914 = vmatprep.subr.mxu0 0.0
        %1915 = vmatpush1.msra.mxu0 0.0
        %1916 = vmatprep.subr.mxu0 0.0
        %1917 = vmatpush1.msra.mxu0 0.0
        %1918 = vmatprep.mubr.f32.mxu0 0.0
        %1919 = vmatmul.mubr.f32.gmra.mrb[0].mxu0 %v1759
        %v1920 = vpop.f32.mrb[0].mxu0
        %v1921 = vadd.f32 %v1756, %v1920
        %v1922 = vpop.f32.mrb[0].mxu0
        %1923 = vmatprep.mubr.f32.mxu0 0.0
        %1924 = vmatmul.mubr.f32.gmra.mrb[0].mxu0 %v1762
        %v1925 = vpop.f32.mrb[0].mxu0
        %v1926 = vadd.f32 %v1756, %v1925
        %v1927 = vpop.f32.mrb[0].mxu0
        %1928 = vmatprep.mubr.f32.mxu0 0.0
        %1929 = vmatmul.mubr.f32.gmra.mrb[0].mxu0 %v1765
        %v1930 = vpop.f32.mrb[0].mxu0
        %v1931 = vadd.f32 %v1756, %v1930
        %v1932 = vpop.f32.mrb[0].mxu0
        %1933 = vmatprep.mubr.f32.mxu0 0.0
        %1934 = vmatmul.mubr.f32.gmra.mrb[0].mxu0 %v1768
        %v1935 = vpop.f32.mrb[0].mxu0
        %v1936 = vadd.f32 %v1756, %v1935
        %v1937 = vpop.f32.mrb[0].mxu0
        %1938 = vmatprep.mubr.f32.mxu0 0.0
        %1939 = vmatmul.mubr.f32.gmra.mrb[0].mxu0 %v1771
        %v1940 = vpop.f32.mrb[0].mxu0
        %v1941 = vadd.f32 %v1756, %v1940
        %v1942 = vpop.f32.mrb[0].mxu0
        %1943 = vmatprep.mubr.f32.mxu0 0.0
        %1944 = vmatmul.mubr.f32.gmra.mrb[0].mxu0 %v1774
        %v1945 = vpop.f32.mrb[0].mxu0
        %v1946 = vadd.f32 %v1756, %v1945
        %v1947 = vpop.f32.mrb[0].mxu0
        %1948 = vmatprep.mubr.f32.mxu0 0.0
        %1949 = vmatmul.mubr.f32.gmra.mrb[0].mxu0 %v1777
        %v1950 = vpop.f32.mrb[0].mxu0
        %v1951 = vadd.f32 %v1756, %v1950
        %v1952 = vpop.f32.mrb[0].mxu0
        %1953 = vmatprep.mubr.f32.mxu0 0.0
        %1954 = vmatmul.mubr.f32.gmra.mrb[0].mxu0 %v1780
        %v1955 = vpop.f32.mrb[0].mxu0
        %v1956 = vadd.f32 %v1756, %v1955
        %v1957 = vpop.f32.mrb[0].mxu0
        %1958 = vmatprep.mubr.f32.mxu0 0.0
        %1959 = vmatmul.mubr.f32.gmra.mrb[0].mxu0 %v1783
        %v1960 = vpop.f32.mrb[0].mxu0
        %v1961 = vadd.f32 %v1756, %v1960
        %v1962 = vpop.f32.mrb[0].mxu0
        %1963 = vmatprep.mubr.f32.mxu0 0.0
        %1964 = vmatmul.mubr.f32.gmra.mrb[0].mxu0 %v1786
        %v1965 = vpop.f32.mrb[0].mxu0
        %v1966 = vadd.f32 %v1756, %v1965
        %v1967 = vpop.f32.mrb[0].mxu0
        %1968 = vmatprep.mubr.f32.mxu0 0.0
        %1969 = vmatmul.mubr.f32.gmra.mrb[0].mxu0 %v1789
        %v1970 = vpop.f32.mrb[0].mxu0
        %v1971 = vadd.f32 %v1756, %v1970
        %v1972 = vpop.f32.mrb[0].mxu0
        %1973 = vmatprep.mubr.f32.mxu0 0.0
        %1974 = vmatmul.mubr.f32.gmra.mrb[0].mxu0 %v1792
        %v1975 = vpop.f32.mrb[0].mxu0
        %v1976 = vadd.f32 %v1756, %v1975
        %v1977 = vpop.f32.mrb[0].mxu0
        %1978 = vmatprep.mubr.f32.mxu0 0.0
        %1979 = vmatmul.mubr.f32.gmra.mrb[0].mxu0 %v1795
        %v1980 = vpop.f32.mrb[0].mxu0
        %v1981 = vadd.f32 %v1756, %v1980
        %v1982 = vpop.f32.mrb[0].mxu0
        %1983 = vmatprep.mubr.f32.mxu0 0.0
        %1984 = vmatmul.mubr.f32.gmra.mrb[0].mxu0 %v1798
        %v1985 = vpop.f32.mrb[0].mxu0
        %v1986 = vadd.f32 %v1756, %v1985
        %v1987 = vpop.f32.mrb[0].mxu0
        %1988 = vmatprep.mubr.f32.mxu0 0.0
        %1989 = vmatmul.mubr.f32.gmra.mrb[0].mxu0 %v1801
        %v1990 = vpop.f32.mrb[0].mxu0
        %v1991 = vadd.f32 %v1756, %v1990
        %v1992 = vpop.f32.mrb[0].mxu0
        %1993 = vmatprep.mubr.f32.mxu0 0.0
        %1994 = vmatmul.mubr.f32.gmra.mrb[0].mxu0 %v1804
        %v1995 = vpop.f32.mrb[0].mxu0
        %v1996 = vadd.f32 %v1756, %v1995
        %v1997 = vpop.f32.mrb[0].mxu0
        %1998 = vmatprep.mubr.f32.mxu0 0.0
        %1999 = vmatmul.mubr.f32.gmra.mrb[0].mxu0 %v1807
        %v2000 = vpop.f32.mrb[0].mxu0
        %v2001 = vadd.f32 %v1756, %v2000
        %v2002 = vpop.f32.mrb[0].mxu0
        %2003 = vmatprep.mubr.f32.mxu0 0.0
        %2004 = vmatmul.mubr.f32.gmra.mrb[0].mxu0 %v1810
        %v2005 = vpop.f32.mrb[0].mxu0
        %v2006 = vadd.f32 %v1756, %v2005
        %v2007 = vpop.f32.mrb[0].mxu0
        %2008 = vmatprep.mubr.f32.mxu0 0.0
        %2009 = vmatmul.mubr.f32.gmra.mrb[0].mxu0 %v1813
        %v2010 = vpop.f32.mrb[0].mxu0
        %v2011 = vadd.f32 %v1756, %v2010
        %v2012 = vpop.f32.mrb[0].mxu0
        %2013 = vmatprep.mubr.f32.mxu0 0.0
        %2014 = vmatmul.mubr.f32.gmra.mrb[0].mxu0 %v1816
        %v2015 = vpop.f32.mrb[0].mxu0
        %v2016 = vadd.f32 %v1756, %v2015
        %v2017 = vpop.f32.mrb[0].mxu0
        %2018 = vmatprep.mubr.f32.mxu0 0.0
        %2019 = vmatmul.mubr.f32.gmra.mrb[0].mxu0 %v1819
        %v2020 = vpop.f32.mrb[0].mxu0
        %v2021 = vadd.f32 %v1756, %v2020
        %v2022 = vpop.f32.mrb[0].mxu0
        %2023 = vmatprep.mubr.f32.mxu0 0.0
        %2024 = vmatmul.mubr.f32.gmra.mrb[0].mxu0 %v1822
        %v2025 = vpop.f32.mrb[0].mxu0
        %v2026 = vadd.f32 %v1756, %v2025
        %v2027 = vpop.f32.mrb[0].mxu0
        %2028 = vmatprep.mubr.f32.mxu0 0.0
        %2029 = vmatmul.mubr.f32.gmra.mrb[0].mxu0 %v1825
        %v2030 = vpop.f32.mrb[0].mxu0
        %v2031 = vadd.f32 %v1756, %v2030
        %v2032 = vpop.f32.mrb[0].mxu0
        %2033 = vmatprep.mubr.f32.mxu0 0.0
        %2034 = vmatmul.mubr.f32.gmra.mrb[0].mxu0 %v1828
        %v2035 = vpop.f32.mrb[0].mxu0
        %v2036 = vadd.f32 %v1756, %v2035
        %v2037 = vpop.f32.mrb[0].mxu0
        %2038 = vmatprep.mubr.f32.mxu0 0.0
        %2039 = vmatmul.mubr.f32.gmra.mrb[0].mxu0 %v1831
        %v2040 = vpop.f32.mrb[0].mxu0
        %v2041 = vadd.f32 %v1756, %v2040
        %v2042 = vpop.f32.mrb[0].mxu0
        %2043 = vmatprep.mubr.f32.mxu0 0.0
        %2044 = vmatmul.mubr.f32.gmra.mrb[0].mxu0 %v1834
        %v2045 = vpop.f32.mrb[0].mxu0
        %v2046 = vadd.f32 %v1756, %v2045
        %v2047 = vpop.f32.mrb[0].mxu0
        %2048 = vmatprep.mubr.f32.mxu0 0.0
        %2049 = vmatmul.mubr.f32.gmra.mrb[0].mxu0 %v1837
        %v2050 = vpop.f32.mrb[0].mxu0
        %v2051 = vadd.f32 %v1756, %v2050
        %v2052 = vpop.f32.mrb[0].mxu0
        %2053 = vmatprep.mubr.f32.mxu0 0.0
        %2054 = vmatmul.mubr.f32.gmra.mrb[0].mxu0 %v1840
        %v2055 = vpop.f32.mrb[0].mxu0
        %v2056 = vadd.f32 %v1756, %v2055
        %v2057 = vpop.f32.mrb[0].mxu0
        %2058 = vmatprep.mubr.f32.mxu0 0.0
        %2059 = vmatmul.mubr.f32.gmra.mrb[0].mxu0 %v1843
        %v2060 = vpop.f32.mrb[0].mxu0
        %v2061 = vadd.f32 %v1756, %v2060
        %v2062 = vpop.f32.mrb[0].mxu0
        %2063 = vmatprep.mubr.f32.mxu0 0.0
        %2064 = vmatmul.mubr.f32.gmra.mrb[0].mxu0 %v1846
        %v2065 = vpop.f32.mrb[0].mxu0
        %v2066 = vadd.f32 %v1756, %v2065
        %v2067 = vpop.f32.mrb[0].mxu0
        %2068 = vmatprep.mubr.f32.mxu0 0.0
        %2069 = vmatmul.mubr.f32.gmra.mrb[0].mxu0 %v1849
        %v2070 = vpop.f32.mrb[0].mxu0
        %v2071 = vadd.f32 %v1756, %v2070
        %v2072 = vpop.f32.mrb[0].mxu0
        %2073 = vmatprep.mubr.f32.mxu0 0.0
        %2074 = vmatmul.mubr.f32.gmra.mrb[0].mxu0 %v1852
        %v2075 = vpop.f32.mrb[0].mxu0
        %v2076 = vadd.f32 %v1756, %v2075
        %v2077 = vpop.f32.mrb[0].mxu0
        %2078 = vdwg.mxu0
        %v2079 = vmax.f32 %v1921, 0.0
        %v2080 = vmax.f32 %v1926, 0.0
        %v2081 = vmax.f32 %v1931, 0.0
        %v2082 = vmax.f32 %v1936, 0.0
        %v2083 = vmax.f32 %v1941, 0.0
        %v2084 = vmax.f32 %v1946, 0.0
        %v2085 = vmax.f32 %v1951, 0.0
        %v2086 = vmax.f32 %v1956, 0.0
        %v2087 = vmax.f32 %v1961, 0.0
        %v2088 = vmax.f32 %v1966, 0.0
        %v2089 = vmax.f32 %v1971, 0.0
        %v2090 = vmax.f32 %v1976, 0.0
        %v2091 = vmax.f32 %v1981, 0.0
        %v2092 = vmax.f32 %v1986, 0.0
        %v2093 = vmax.f32 %v1991, 0.0
        %v2094 = vmax.f32 %v1996, 0.0
        %v2095 = vmax.f32 %v2001, 0.0
        %v2096 = vmax.f32 %v2006, 0.0
        %v2097 = vmax.f32 %v2011, 0.0
        %v2098 = vmax.f32 %v2016, 0.0
        %v2099 = vmax.f32 %v2021, 0.0
        %v2100 = vmax.f32 %v2026, 0.0
        %v2101 = vmax.f32 %v2031, 0.0
        %v2102 = vmax.f32 %v2036, 0.0
        %v2103 = vmax.f32 %v2041, 0.0
        %v2104 = vmax.f32 %v2046, 0.0
        %v2105 = vmax.f32 %v2051, 0.0
        %v2106 = vmax.f32 %v2056, 0.0
        %v2107 = vmax.f32 %v2061, 0.0
        %v2108 = vmax.f32 %v2066, 0.0
        %v2109 = vmax.f32 %v2071, 0.0
        %v2110 = vmax.f32 %v2076, 0.0
        %v2111 = vld [vmem:[%s7] sm:$0xff]
        %v2112 = vld [vmem:[%s7 + $0x8] sm:$0xff]
        %v2113 = vld [vmem:[%s7 + $0x10] sm:$0xff]
        %v2114 = vld [vmem:[%s7 + $0x18] sm:$0xff]
        %2115 = vmatprep.subr.mxu0 0.0
        %2116 = vmatpush1.msra.mxu0 %v2111
        %2117 = vmatprep.subr.mxu0 0.0
        %2118 = vmatpush1.msra.mxu0 %v2112
        %2119 = vmatprep.subr.mxu0 0.0
        %2120 = vmatpush1.msra.mxu0 %v2113
        %2121 = vmatprep.subr.mxu0 0.0
        %2122 = vmatpush1.msra.mxu0 %v2114
        %2123 = vmatprep.subr.mxu0 0.0
        %2124 = vmatpush1.msra.mxu0 0.0
        %2125 = vmatprep.subr.mxu0 0.0
        %2126 = vmatpush1.msra.mxu0 0.0
        %2127 = vmatprep.subr.mxu0 0.0
        %2128 = vmatpush1.msra.mxu0 0.0
        %2129 = vmatprep.subr.mxu0 0.0
        %2130 = vmatpush1.msra.mxu0 0.0
        %2131 = vmatprep.subr.mxu0 0.0
        %2132 = vmatpush1.msra.mxu0 0.0
        %2133 = vmatprep.subr.mxu0 0.0
        %2134 = vmatpush1.msra.mxu0 0.0
        %2135 = vmatprep.subr.mxu0 0.0
        %2136 = vmatpush1.msra.mxu0 0.0
        %2137 = vmatprep.subr.mxu0 0.0
        %2138 = vmatpush1.msra.mxu0 0.0
        %2139 = vmatprep.subr.mxu0 0.0
        %2140 = vmatpush1.msra.mxu0 0.0
        %2141 = vmatprep.subr.mxu0 0.0
        %2142 = vmatpush1.msra.mxu0 0.0
        %2143 = vmatprep.subr.mxu0 0.0
        %2144 = vmatpush1.msra.mxu0 0.0
        %2145 = vmatprep.subr.mxu0 0.0
        %2146 = vmatpush1.msra.mxu0 0.0
        %2147 = vmatprep.subr.mxu0 0.0
        %2148 = vmatpush1.msra.mxu0 0.0
        %2149 = vmatprep.subr.mxu0 0.0
        %2150 = vmatpush1.msra.mxu0 0.0
        %2151 = vmatprep.subr.mxu0 0.0
        %2152 = vmatpush1.msra.mxu0 0.0
        %2153 = vmatprep.subr.mxu0 0.0
        %2154 = vmatpush1.msra.mxu0 0.0
        %2155 = vmatprep.subr.mxu0 0.0
        %2156 = vmatpush1.msra.mxu0 0.0
        %2157 = vmatprep.subr.mxu0 0.0
        %2158 = vmatpush1.msra.mxu0 0.0
        %2159 = vmatprep.subr.mxu0 0.0
        %2160 = vmatpush1.msra.mxu0 0.0
        %2161 = vmatprep.subr.mxu0 0.0
        %2162 = vmatpush1.msra.mxu0 0.0
        %2163 = vmatprep.subr.mxu0 0.0
        %2164 = vmatpush1.msra.mxu0 0.0
        %2165 = vmatprep.subr.mxu0 0.0
        %2166 = vmatpush1.msra.mxu0 0.0
        %2167 = vmatprep.subr.mxu0 0.0
        %2168 = vmatpush1.msra.mxu0 0.0
        %2169 = vmatprep.subr.mxu0 0.0
        %2170 = vmatpush1.msra.mxu0 0.0
        %2171 = vmatprep.subr.mxu0 0.0
        %2172 = vmatpush1.msra.mxu0 0.0
        %2173 = vmatprep.subr.mxu0 0.0
        %2174 = vmatpush1.msra.mxu0 0.0
        %2175 = vmatprep.subr.mxu0 0.0
        %2176 = vmatpush1.msra.mxu0 0.0
        %2177 = vmatprep.subr.mxu0 0.0
        %2178 = vmatpush1.msra.mxu0 0.0
        %2179 = vmatprep.mubr.f32.mxu0 0.0
        %2180 = vmatmul.mubr.f32.gmra.mrb[0].mxu0 %v349
        %v2181 = vpop.f32.mrb[0].mxu0
        %v2182 = vadd.f32 %v2079, %v2181
        %v2183 = vpop.f32.mrb[0].mxu0
        %2184 = vmatprep.mubr.f32.mxu0 0.0
        %2185 = vmatmul.mubr.f32.gmra.mrb[0].mxu0 %v352
        %v2186 = vpop.f32.mrb[0].mxu0
        %v2187 = vadd.f32 %v2080, %v2186
        %v2188 = vpop.f32.mrb[0].mxu0
        %2189 = vmatprep.mubr.f32.mxu0 0.0
        %2190 = vmatmul.mubr.f32.gmra.mrb[0].mxu0 %v355
        %v2191 = vpop.f32.mrb[0].mxu0
        %v2192 = vadd.f32 %v2081, %v2191
        %v2193 = vpop.f32.mrb[0].mxu0
        %2194 = vmatprep.mubr.f32.mxu0 0.0
        %2195 = vmatmul.mubr.f32.gmra.mrb[0].mxu0 %v358
        %v2196 = vpop.f32.mrb[0].mxu0
        %v2197 = vadd.f32 %v2082, %v2196
        %v2198 = vpop.f32.mrb[0].mxu0
        %2199 = vmatprep.mubr.f32.mxu0 0.0
        %2200 = vmatmul.mubr.f32.gmra.mrb[0].mxu0 %v361
        %v2201 = vpop.f32.mrb[0].mxu0
        %v2202 = vadd.f32 %v2083, %v2201
        %v2203 = vpop.f32.mrb[0].mxu0
        %2204 = vmatprep.mubr.f32.mxu0 0.0
        %2205 = vmatmul.mubr.f32.gmra.mrb[0].mxu0 %v364
        %v2206 = vpop.f32.mrb[0].mxu0
        %v2207 = vadd.f32 %v2084, %v2206
        %v2208 = vpop.f32.mrb[0].mxu0
        %2209 = vmatprep.mubr.f32.mxu0 0.0
        %2210 = vmatmul.mubr.f32.gmra.mrb[0].mxu0 %v367
        %v2211 = vpop.f32.mrb[0].mxu0
        %v2212 = vadd.f32 %v2085, %v2211
        %v2213 = vpop.f32.mrb[0].mxu0
        %2214 = vmatprep.mubr.f32.mxu0 0.0
        %2215 = vmatmul.mubr.f32.gmra.mrb[0].mxu0 %v370
        %v2216 = vpop.f32.mrb[0].mxu0
        %v2217 = vadd.f32 %v2086, %v2216
        %v2218 = vpop.f32.mrb[0].mxu0
        %2219 = vmatprep.mubr.f32.mxu0 0.0
        %2220 = vmatmul.mubr.f32.gmra.mrb[0].mxu0 %v373
        %v2221 = vpop.f32.mrb[0].mxu0
        %v2222 = vadd.f32 %v2087, %v2221
        %v2223 = vpop.f32.mrb[0].mxu0
        %2224 = vmatprep.mubr.f32.mxu0 0.0
        %2225 = vmatmul.mubr.f32.gmra.mrb[0].mxu0 %v376
        %v2226 = vpop.f32.mrb[0].mxu0
        %v2227 = vadd.f32 %v2088, %v2226
        %v2228 = vpop.f32.mrb[0].mxu0
        %2229 = vmatprep.mubr.f32.mxu0 0.0
        %2230 = vmatmul.mubr.f32.gmra.mrb[0].mxu0 %v379
        %v2231 = vpop.f32.mrb[0].mxu0
        %v2232 = vadd.f32 %v2089, %v2231
        %v2233 = vpop.f32.mrb[0].mxu0
        %2234 = vmatprep.mubr.f32.mxu0 0.0
        %2235 = vmatmul.mubr.f32.gmra.mrb[0].mxu0 %v382
        %v2236 = vpop.f32.mrb[0].mxu0
        %v2237 = vadd.f32 %v2090, %v2236
        %v2238 = vpop.f32.mrb[0].mxu0
        %2239 = vmatprep.mubr.f32.mxu0 0.0
        %2240 = vmatmul.mubr.f32.gmra.mrb[0].mxu0 %v385
        %v2241 = vpop.f32.mrb[0].mxu0
        %v2242 = vadd.f32 %v2091, %v2241
        %v2243 = vpop.f32.mrb[0].mxu0
        %2244 = vmatprep.mubr.f32.mxu0 0.0
        %2245 = vmatmul.mubr.f32.gmra.mrb[0].mxu0 %v388
        %v2246 = vpop.f32.mrb[0].mxu0
        %v2247 = vadd.f32 %v2092, %v2246
        %v2248 = vpop.f32.mrb[0].mxu0
        %2249 = vmatprep.mubr.f32.mxu0 0.0
        %2250 = vmatmul.mubr.f32.gmra.mrb[0].mxu0 %v391
        %v2251 = vpop.f32.mrb[0].mxu0
        %v2252 = vadd.f32 %v2093, %v2251
        %v2253 = vpop.f32.mrb[0].mxu0
        %2254 = vmatprep.mubr.f32.mxu0 0.0
        %2255 = vmatmul.mubr.f32.gmra.mrb[0].mxu0 %v394
        %v2256 = vpop.f32.mrb[0].mxu0
        %v2257 = vadd.f32 %v2094, %v2256
        %v2258 = vpop.f32.mrb[0].mxu0
        %2259 = vmatprep.mubr.f32.mxu0 0.0
        %2260 = vmatmul.mubr.f32.gmra.mrb[0].mxu0 %v397
        %v2261 = vpop.f32.mrb[0].mxu0
        %v2262 = vadd.f32 %v2095, %v2261
        %v2263 = vpop.f32.mrb[0].mxu0
        %2264 = vmatprep.mubr.f32.mxu0 0.0
        %2265 = vmatmul.mubr.f32.gmra.mrb[0].mxu0 %v400
        %v2266 = vpop.f32.mrb[0].mxu0
        %v2267 = vadd.f32 %v2096, %v2266
        %v2268 = vpop.f32.mrb[0].mxu0
        %2269 = vmatprep.mubr.f32.mxu0 0.0
        %2270 = vmatmul.mubr.f32.gmra.mrb[0].mxu0 %v403
        %v2271 = vpop.f32.mrb[0].mxu0
        %v2272 = vadd.f32 %v2097, %v2271
        %v2273 = vpop.f32.mrb[0].mxu0
        %2274 = vmatprep.mubr.f32.mxu0 0.0
        %2275 = vmatmul.mubr.f32.gmra.mrb[0].mxu0 %v406
        %v2276 = vpop.f32.mrb[0].mxu0
        %v2277 = vadd.f32 %v2098, %v2276
        %v2278 = vpop.f32.mrb[0].mxu0
        %2279 = vmatprep.mubr.f32.mxu0 0.0
        %2280 = vmatmul.mubr.f32.gmra.mrb[0].mxu0 %v409
        %v2281 = vpop.f32.mrb[0].mxu0
        %v2282 = vadd.f32 %v2099, %v2281
        %v2283 = vpop.f32.mrb[0].mxu0
        %2284 = vmatprep.mubr.f32.mxu0 0.0
        %2285 = vmatmul.mubr.f32.gmra.mrb[0].mxu0 %v412
        %v2286 = vpop.f32.mrb[0].mxu0
        %v2287 = vadd.f32 %v2100, %v2286
        %v2288 = vpop.f32.mrb[0].mxu0
        %2289 = vmatprep.mubr.f32.mxu0 0.0
        %2290 = vmatmul.mubr.f32.gmra.mrb[0].mxu0 %v415
        %v2291 = vpop.f32.mrb[0].mxu0
        %v2292 = vadd.f32 %v2101, %v2291
        %v2293 = vpop.f32.mrb[0].mxu0
        %2294 = vmatprep.mubr.f32.mxu0 0.0
        %2295 = vmatmul.mubr.f32.gmra.mrb[0].mxu0 %v418
        %v2296 = vpop.f32.mrb[0].mxu0
        %v2297 = vadd.f32 %v2102, %v2296
        %v2298 = vpop.f32.mrb[0].mxu0
        %2299 = vmatprep.mubr.f32.mxu0 0.0
        %2300 = vmatmul.mubr.f32.gmra.mrb[0].mxu0 %v421
        %v2301 = vpop.f32.mrb[0].mxu0
        %v2302 = vadd.f32 %v2103, %v2301
        %v2303 = vpop.f32.mrb[0].mxu0
        %2304 = vmatprep.mubr.f32.mxu0 0.0
        %2305 = vmatmul.mubr.f32.gmra.mrb[0].mxu0 %v424
        %v2306 = vpop.f32.mrb[0].mxu0
        %v2307 = vadd.f32 %v2104, %v2306
        %v2308 = vpop.f32.mrb[0].mxu0
        %2309 = vmatprep.mubr.f32.mxu0 0.0
        %2310 = vmatmul.mubr.f32.gmra.mrb[0].mxu0 %v427
        %v2311 = vpop.f32.mrb[0].mxu0
        %v2312 = vadd.f32 %v2105, %v2311
        %v2313 = vpop.f32.mrb[0].mxu0
        %2314 = vmatprep.mubr.f32.mxu0 0.0
        %2315 = vmatmul.mubr.f32.gmra.mrb[0].mxu0 %v430
        %v2316 = vpop.f32.mrb[0].mxu0
        %v2317 = vadd.f32 %v2106, %v2316
        %v2318 = vpop.f32.mrb[0].mxu0
        %2319 = vmatprep.mubr.f32.mxu0 0.0
        %2320 = vmatmul.mubr.f32.gmra.mrb[0].mxu0 %v433
        %v2321 = vpop.f32.mrb[0].mxu0
        %v2322 = vadd.f32 %v2107, %v2321
        %v2323 = vpop.f32.mrb[0].mxu0
        %2324 = vmatprep.mubr.f32.mxu0 0.0
        %2325 = vmatmul.mubr.f32.gmra.mrb[0].mxu0 %v436
        %v2326 = vpop.f32.mrb[0].mxu0
        %v2327 = vadd.f32 %v2108, %v2326
        %v2328 = vpop.f32.mrb[0].mxu0
        %2329 = vmatprep.mubr.f32.mxu0 0.0
        %2330 = vmatmul.mubr.f32.gmra.mrb[0].mxu0 %v439
        %v2331 = vpop.f32.mrb[0].mxu0
        %v2332 = vadd.f32 %v2109, %v2331
        %v2333 = vpop.f32.mrb[0].mxu0
        %2334 = vmatprep.mubr.f32.mxu0 0.0
        %2335 = vmatmul.mubr.f32.gmra.mrb[0].mxu0 %v442
        %v2336 = vpop.f32.mrb[0].mxu0
        %v2337 = vadd.f32 %v2110, %v2336
        %v2338 = vpop.f32.mrb[0].mxu0
        %2339 = vdwg.mxu0
        %2340 = vst.msk [vmem:[%s298] sm:$0xff] %vm347, %v2182
        %2341 = vst.msk [vmem:[%s298 + $0x8] sm:$0xff] %vm347, %v2187
        %2342 = vst.msk [vmem:[%s298 + $0x10] sm:$0xff] %vm347, %v2192
        %2343 = vst.msk [vmem:[%s298 + $0x18] sm:$0xff] %vm347, %v2197
        %2344 = vst.msk [vmem:[%s298 + $0x20] sm:$0xff] %vm347, %v2202
        %2345 = vst.msk [vmem:[%s298 + $0x28] sm:$0xff] %vm347, %v2207
        %2346 = vst.msk [vmem:[%s298 + $0x30] sm:$0xff] %vm347, %v2212
        %2347 = vst.msk [vmem:[%s298 + $0x38] sm:$0xff] %vm347, %v2217
        %2348 = vst.msk [vmem:[%s298 + $0x40] sm:$0xff] %vm347, %v2222
        %2349 = vst.msk [vmem:[%s298 + $0x48] sm:$0xff] %vm347, %v2227
        %2350 = vst.msk [vmem:[%s298 + $0x50] sm:$0xff] %vm347, %v2232
        %2351 = vst.msk [vmem:[%s298 + $0x58] sm:$0xff] %vm347, %v2237
        %2352 = vst.msk [vmem:[%s298 + $0x60] sm:$0xff] %vm347, %v2242
        %2353 = vst.msk [vmem:[%s298 + $0x68] sm:$0xff] %vm347, %v2247
        %2354 = vst.msk [vmem:[%s298 + $0x70] sm:$0xff] %vm347, %v2252
        %2355 = vst.msk [vmem:[%s298 + $0x78] sm:$0xff] %vm347, %v2257
        %2356 = vst.msk [vmem:[%s298 + $0x80] sm:$0xff] %vm347, %v2262
        %2357 = vst.msk [vmem:[%s298 + $0x88] sm:$0xff] %vm347, %v2267
        %2358 = vst.msk [vmem:[%s298 + $0x90] sm:$0xff] %vm347, %v2272
        %2359 = vst.msk [vmem:[%s298 + $0x98] sm:$0xff] %vm347, %v2277
        %2360 = vst.msk [vmem:[%s298 + $0xa0] sm:$0xff] %vm347, %v2282
        %2361 = vst.msk [vmem:[%s298 + $0xa8] sm:$0xff] %vm347, %v2287
        %2362 = vst.msk [vmem:[%s298 + $0xb0] sm:$0xff] %vm347, %v2292
        %2363 = vst.msk [vmem:[%s298 + $0xb8] sm:$0xff] %vm347, %v2297
        %2364 = vst.msk [vmem:[%s298 + $0xc0] sm:$0xff] %vm347, %v2302
        %2365 = vst.msk [vmem:[%s298 + $0xc8] sm:$0xff] %vm347, %v2307
        %2366 = vst.msk [vmem:[%s298 + $0xd0] sm:$0xff] %vm347, %v2312
        %2367 = vst.msk [vmem:[%s298 + $0xd8] sm:$0xff] %vm347, %v2317
        %2368 = vst.msk [vmem:[%s298 + $0xe0] sm:$0xff] %vm347, %v2322
        %2369 = vst.msk [vmem:[%s298 + $0xe8] sm:$0xff] %vm347, %v2327
        %2370 = vst.msk [vmem:[%s298 + $0xf0] sm:$0xff] %vm347, %v2332
        %2371 = vst.msk [vmem:[%s298 + $0xf8] sm:$0xff] %vm347, %v2337
        %s2372 = sand.u32 %s203, 1
        %s2373 = scalar_lea.sflag [#allocation4], %s2372
        %s2374 = sand.u32 %s203, 1
        %s2375 = smul.addr %s2374, 256
        %s2376 = scalar_lea.vmem [#allocation3], %s2375
        // Predicated region
        $region53: #{shuffle_unit_forward.1} parent=51 // pred_check
          %p2377 = pneg %p213
        $region54: #{shuffle_unit_forward.1} parent=51 // pred_check_branch
          %2379 = sbr.rel (%p2377) target = $region56
        $region55: #{shuffle_unit_forward.1} parent=51 // pred_region
          %s2381 = ssub.s32 4096, 4096
          %2382 = vsyncadd %s2373, %s2381
          %s2383 = smul.addr %s22, 32
          %s2384 = smul.addr %s2383, 128
          %s2385 = scalar_lea.hbm %s8, %s2384
          %s2386 = sshll.u32 %s2376, 4
          %s2387 = int_to_ptr.vmem [resolvable:$true] %s2386
          %2392 = dma.vmem_to_hbm [thread:$0]  %s2387, 4096, %s2385, %s2373, 128, 128, 8
        $region56: #{shuffle_unit_forward.1} parent=51 // pred_fallthru
          _
      $region52: #{shuffle_unit_forward.1} parent=5 // pred_fallthru
        _
      %p2393 = scmp.le.s32.totalorder 2, %s17
      // Predicated region
      $region57: #{shuffle_unit_forward.1} parent=5 // pred_check
        %p2394 = pneg %p2393
      $region58: #{shuffle_unit_forward.1} parent=5 // pred_check_branch
        %2396 = sbr.rel (%p2394) target = $region60
      $region59: #{shuffle_unit_forward.1} parent=5 // pred_region
        %s2397 = ssub.s32 %s17, 2
        // Predicated region
        $region61: #{shuffle_unit_forward.1} parent=59 // pred_check
          %p2398 = pneg %p219
        $region62: #{shuffle_unit_forward.1} parent=59 // pred_check_branch
          %2400 = sbr.rel (%p2398) target = $region64
        $region63: #{shuffle_unit_forward.1} parent=59 // pred_region
          %s2401 = sand.u32 %s204, 1
          %s2402 = scalar_lea.sflag [#allocation4], %s2401
          %s2403 = sand.u32 %s204, 1
          %s2404 = smul.addr %s2403, 256
          %s2405 = scalar_lea.vmem [#allocation3], %s2404
          %2406 = dma.done %s2402, 4096
        $region64: #{shuffle_unit_forward.1} parent=59 // pred_fallthru
          _
      $region60: #{shuffle_unit_forward.1} parent=5 // pred_fallthru
        _
    $region6: #{shuffle_unit_forward.1} parent=1 // loop_footer
      %s21 = sadd.s32 1, %s17
    $region7: #{shuffle_unit_forward.1} parent=1 // loop_footer_branch
      %16 = sbr.rel target = $region3
    $region8: #{shuffle_unit_forward.1} parent=1 // loop_exit
      _
    %2407 = vsyncpa [#allocation4], 1
    %s2408 = scalar_lea.sflag [#allocation4], 1
    %2409 = vsyncpa %s2408, 1

</llo_original>
